<compile_context>
chip_gen: v7x
topology: tpu7x:2x2x1
jax: 0.10.0
libtpu: 0.0.40
codegen_flags: <defaults>
</compile_context>

<pallas_src>
import math

import jax
import jax.numpy as jnp
from jax.experimental import pallas as pl
from jax.experimental.pallas import tpu as pltpu

D_MODEL = 32
D_FF = 64
N_HEADS = 4
HEAD_DIM = D_MODEL // N_HEADS
KERNEL_SIZE = 25      # SeriesDecomposition default (AvgPool1d k=25, pad=12)
SUBWIN = 5            # 25 = 5 * 5 two-level sliding-sum factorization
EPS = 1e-5            # nn.LayerNorm default

# Matmul-operand dtype.  bf16 gives ~2x MXU throughput on v6e/v7x and is also
# native on v5e's MXU; accumulation stays f32 via preferred_element_type and
# all elementwise math stays f32.
MXU_DTYPE = jnp.bfloat16


def _mm(a, b):
    """MXU matmul with f32 accumulation; operands cast to MXU_DTYPE."""
    return jnp.dot(a.astype(MXU_DTYPE), b.astype(MXU_DTYPE),
                   preferred_element_type=jnp.float32)


def encoder_layer_kernel(xpad_ref, wqkv_ref, bqkv_ref, wo_ref, bo_ref,
                         w1_ref, b1_ref, w2_ref, b2_ref, gamma_ref, beta_ref,
                         out_ref, s5_ref):
    tb, l, d = out_ref.shape
    rows = tb * l
    half = KERNEL_SIZE // 2

    # --- SeriesDecomposition: 25-tap sliding mean (zero pad, count_include_pad)
    # Two-level tree: level 1 builds 5-tap partial sums over the padded
    # sequence and stores them to VMEM scratch; level 2 re-loads 5 strided
    # slices of the scratch (cheap ref addressing instead of value relayouts).
    lvl1_len = l + (SUBWIN - 1) * SUBWIN               # l + 20
    acc = xpad_ref[:, 0:lvl1_len, :]
    for i in range(1, SUBWIN):                         # 4 shifted loads + adds
        acc = acc + xpad_ref[:, i:i + lvl1_len, :]
    s5_ref[...] = acc
    tacc = s5_ref[:, 0:l, :]
    for m in range(1, SUBWIN):                         # 4 strided loads + adds
        off = m * SUBWIN
        tacc = tacc + s5_ref[:, off:off + l, :]
    trend = tacc * (1.0 / KERNEL_SIZE)                 # (TB, L, D)

    x3 = xpad_ref[:, half:half + l, :]                 # the unpadded x itself
    seasonal3 = x3 - trend
    seasonal = seasonal3.reshape(rows, d)              # (TB*L, D) working set

    # --- MultiheadAttention (4 heads, batch_first, eval-mode dropout). -------
    # Single fused QKV projection (N = 96); 1/sqrt(head_dim) is pre-folded
    # into the Q columns on the host.
    qkv = _mm(seasonal, wqkv_ref[...]) + bqkv_ref[...]     # (TB*L, 3D) f32

    ctx_heads = []
    for h in range(N_HEADS):                               # static unroll
        lo = h * HEAD_DIM
        qh = qkv[:, lo:lo + HEAD_DIM].reshape(tb, l, HEAD_DIM)
        kh = qkv[:, d + lo:d + lo + HEAD_DIM].reshape(tb, l, HEAD_DIM)
        vh = qkv[:, 2 * d + lo:2 * d + lo + HEAD_DIM].reshape(tb, l, HEAD_DIM)
        # NOTE: "bqd,bkd->bqk" contracts the last dims of both operands (an
        # "NT" matmul); no materialized transpose of kh is expected.
        s = jnp.einsum("bqd,bkd->bqk",
                       qh.astype(MXU_DTYPE), kh.astype(MXU_DTYPE),
                       preferred_element_type=jnp.float32)  # (TB, L, L)
        s = s - jnp.max(s, axis=-1, keepdims=True)
        p = jnp.exp(s)
        p = p * pl.reciprocal(jnp.sum(p, axis=-1, keepdims=True), approx=True)
        oh = jnp.einsum("bqk,bkd->bqd",
                        p.astype(MXU_DTYPE), vh.astype(MXU_DTYPE),
                        preferred_element_type=jnp.float32)  # (TB, L, hd)
        ctx_heads.append(oh)
    # One lane-axis concat, then ONE output-projection matmul (K = 32).
    ctx = jnp.concatenate(ctx_heads, axis=-1).reshape(rows, d)
    attn = _mm(ctx, wo_ref[...]) + bo_ref[...]              # (TB*L, D)

    # --- Shared LayerNorm; gamma/beta stay (1, D) (implicit broadcast). ------
    gamma = gamma_ref[...]
    beta = beta_ref[...]
    inv_d = 1.0 / d

    def layer_norm(y):
        mu = jnp.sum(y, axis=-1, keepdims=True) * inv_d
        yc = y - mu
        var = jnp.sum(yc * yc, axis=-1, keepdims=True) * inv_d
        return yc * jax.lax.rsqrt(var + EPS) * gamma + beta

    # TODO(synk): nn.Dropout / attention dropout modeled as identity (eval mode)
    h1 = layer_norm(seasonal + attn)

    # --- Feed-forward ---------------------------------------------------------
    ff = _mm(h1, w1_ref[...]) + b1_ref[...]
    ff = jnp.maximum(ff, 0.0)
    ff = _mm(ff, w2_ref[...]) + b2_ref[...]
    h2 = layer_norm(h1 + ff)

    out_ref[...] = h2.reshape(tb, l, d) + trend


def _vmem_budget_bytes(tb, L):
    """Rough per-step VMEM working-set estimate (f32 bytes)."""
    halo = KERNEL_SIZE - 1
    rows = tb * L
    est = 0
    est += 2 * 2 * tb * (L + halo) * D_MODEL * 4       # double-buffered input
    est += 2 * 2 * tb * L * D_MODEL * 4                # double-buffered output
    est += tb * (L + halo - (SUBWIN - 1)) * D_MODEL * 4  # sliding-sum scratch
    est += rows * 3 * D_MODEL * 4                      # fused qkv slab
    est += 3 * tb * L * L * 4                          # per-head score/prob temps
    est += 6 * rows * D_MODEL * 4                      # misc working slabs
    est += 2 * (3 * D_MODEL * D_MODEL + 2 * D_MODEL * D_FF) * 4  # params
    return est


def _pick_block_b(batch, seq, *, target_rows=256, vmem_cap=20 << 20):
    """Batch rows per grid step.

    tb*L >= target_rows amortizes the ~0.35us/step pipeline cost and fills MXU
    rows; tb is capped at B//2 so the "parallel" grid axis has length >= 2
    (both v7x TensorCores busy) and by a VMEM budget (v7x: 64 MiB physical).
    """
    cap = max(1, batch // 2)
    tb = min(cap, max(1, -(-target_rows // seq)))
    while batch % tb:
        tb -= 1
    while tb > 1 and _vmem_budget_bytes(tb, seq) > vmem_cap:
        tb -= 1
        while batch % tb:
            tb -= 1
    return max(tb, 1)


def prepare_params(params):
    """One-time host-side weight prep: transposes + attention-scale fold."""
    D = D_MODEL
    scale = 1.0 / math.sqrt(HEAD_DIM)
    wqkv_t = jnp.asarray(params["wqkv"]).T                 # (D, 3D)
    bqkv = jnp.asarray(params["bqkv"]).reshape(1, 3 * D)
    wqkv_t = wqkv_t.at[:, :D].multiply(scale)              # fold 1/sqrt(hd) into Q
    bqkv = bqkv.at[:, :D].multiply(scale)
    return {
        "wqkv_t": wqkv_t,
        "bqkv": bqkv,
        "wo_t": jnp.asarray(params["wo"]).T,               # (D, D)
        "bo": jnp.asarray(params["bo"]).reshape(1, D),
        "w1_t": jnp.asarray(params["w1"]).T,               # (D, D_FF)
        "b1": jnp.asarray(params["b1"]).reshape(1, D_FF),
        "w2_t": jnp.asarray(params["w2"]).T,               # (D_FF, D)
        "b2": jnp.asarray(params["b2"]).reshape(1, D),
        "gamma": jnp.asarray(params["gamma"]).reshape(1, D),
        "beta": jnp.asarray(params["beta"]).reshape(1, D),
    }


def autoformer_encoder_layer(x, prepared, *, block_b=None):
    B, L, D = x.shape
    assert D == D_MODEL
    half = KERNEL_SIZE // 2

    tb = block_b if block_b is not None else _pick_block_b(B, L)
    assert B % tb == 0
    grid = (B // tb,)

    # Zero-padded halo so the in-kernel sliding sum needs no pad/concat.
    # TODO(synk): for HBM-bound v5e cases, DMA x into a zero-initialized VMEM
    # scratch inside the kernel instead of this host-side pad.
    # TODO(synk): for long sequences (L >~ 1k) tile attention over KV blocks
    # (flash-style) instead of materializing (tb, L, L) scores per head.
    x_pad = jnp.pad(x, ((0, 0), (half, half), (0, 0)))

    def _const_spec(arr):
        # Whole (untiled) parameter block; constant block index => the Pallas
        # pipeline does not re-copy it between consecutive grid steps.
        n = arr.ndim
        return pl.BlockSpec(arr.shape, lambda b, n=n: (0,) * n)

    ordered = [prepared[k] for k in ("wqkv_t", "bqkv", "wo_t", "bo",
                                     "w1_t", "b1", "w2_t", "b2",
                                     "gamma", "beta")]
    in_specs = [pl.BlockSpec((tb, L + 2 * half, D), lambda b: (b, 0, 0))]
    in_specs += [_const_spec(a) for a in ordered]
    out_specs = pl.BlockSpec((tb, L, D), lambda b: (b, 0, 0))

    # Explicit VMEM budget: v5e's default scoped limit is only 16 MiB and v7x
    # has 64 MiB physical, so request what we need with headroom, capped.
    vmem_limit = int(min(max(2 * _vmem_budget_bytes(tb, L), 16 << 20), 64 << 20))

    return pl.pallas_call(
        encoder_layer_kernel,
        out_shape=jax.ShapeDtypeStruct((B, L, D), jnp.float32),
        grid_spec=pltpu.PrefetchScalarGridSpec(
            num_scalar_prefetch=0,
            grid=grid,
            in_specs=in_specs,
            out_specs=out_specs,
            scratch_shapes=[
                pltpu.VMEM((tb, L + (SUBWIN - 1) * SUBWIN, D), jnp.float32)],
        ),
        compiler_params=pltpu.CompilerParams(
            dimension_semantics=("parallel",),
            vmem_limit_bytes=vmem_limit),
    )(x_pad, *ordered)


def init_params(key):
    ks = jax.random.split(key, 4)
    p = {}
    p["wqkv"] = 0.02 * jax.random.normal(ks[0], (3 * D_MODEL, D_MODEL), jnp.float32)
    p["bqkv"] = jnp.zeros((1, 3 * D_MODEL), jnp.float32)
    p["wo"] = 0.02 * jax.random.normal(ks[1], (D_MODEL, D_MODEL), jnp.float32)
    p["bo"] = jnp.zeros((1, D_MODEL), jnp.float32)
    p["w1"] = 0.02 * jax.random.normal(ks[2], (D_FF, D_MODEL), jnp.float32)
    p["b1"] = 0.01 * jnp.ones((1, D_FF), jnp.float32)
    p["w2"] = 0.02 * jax.random.normal(ks[3], (D_MODEL, D_FF), jnp.float32)
    p["b2"] = 0.01 * jnp.ones((1, D_MODEL), jnp.float32)
    p["gamma"] = jnp.ones((1, D_MODEL), jnp.float32)
    p["beta"] = jnp.zeros((1, D_MODEL), jnp.float32)
    return p


def reference_forward(x, params):
    """Pure-JAX f32 reference with identical (eval-mode) semantics."""
    B, L, D = x.shape
    idx = jnp.arange(L)
    A = (jnp.abs(idx[:, None] - idx[None, :]) <= (KERNEL_SIZE // 2))
    A = A.astype(jnp.float32) / float(KERNEL_SIZE)
    trend = jnp.einsum("tl,bld->btd", A, x)
    seasonal = x - trend

    qkv = seasonal @ params["wqkv"].T + params["bqkv"]
    q, k, v = jnp.split(qkv, 3, axis=-1)

    def heads(t):  # (B, L, D) -> (B, H, L, hd)
        return t.reshape(B, L, N_HEADS, HEAD_DIM).transpose(0, 2, 1, 3)

    qh, kh, vh = heads(q), heads(k), heads(v)
    s = jnp.einsum("bhqd,bhkd->bhqk", qh, kh) / math.sqrt(HEAD_DIM)
    p = jax.nn.softmax(s, axis=-1)
    a = jnp.einsum("bhqk,bhkd->bhqd", p, vh).transpose(0, 2, 1, 3).reshape(B, L, D)
    attn = a @ params["wo"].T + params["bo"]

    def ln(y):
        mu = jnp.mean(y, axis=-1, keepdims=True)
        var = jnp.mean((y - mu) ** 2, axis=-1, keepdims=True)
        return (y - mu) * jax.lax.rsqrt(var + EPS) * params["gamma"] + params["beta"]

    h1 = ln(seasonal + attn)
    ff = jnp.maximum(h1 @ params["w1"].T + params["b1"], 0.0) @ params["w2"].T + params["b2"]
    h2 = ln(h1 + ff)
    return h2 + trend


if __name__ == "__main__":
    key = jax.random.PRNGKey(0)
    kx, kp = jax.random.split(key)
    B, L = 2, 8
    x = jax.random.normal(kx, (B, L, D_MODEL), jnp.float32)
    params = init_params(kp)
    prepared = prepare_params(params)

    out = autoformer_encoder_layer(x, prepared)
    out = jax.block_until_ready(out)

    ref = reference_forward(x, params)
    assert out.shape == (B, L, D_MODEL)
    max_err = float(jnp.max(jnp.abs(out - ref)))
    # bf16 MXU operands + pl.reciprocal(approx=True) vs the f32 reference:
    # outputs are O(1) after LayerNorm, so a 2e-2 tolerance is comfortable.
    tol = 2e-2 if MXU_DTYPE == jnp.bfloat16 else 2e-3
    assert jnp.allclose(out, ref, atol=tol, rtol=tol), max_err
    print("KERNEL_OK")
</pallas_src>

<mosaic_0001>
module attributes {stable_mosaic.version = 11 : i64} {
  func.func @encoder_layer_kernel(%arg0: i32, %arg1: memref<1x32x32xf32, #tpu.memory_space<vmem>>, %arg2: memref<32x96xf32, #tpu.memory_space<vmem>>, %arg3: memref<1x96xf32, #tpu.memory_space<vmem>>, %arg4: memref<32x32xf32, #tpu.memory_space<vmem>>, %arg5: memref<1x32xf32, #tpu.memory_space<vmem>>, %arg6: memref<32x64xf32, #tpu.memory_space<vmem>>, %arg7: memref<1x64xf32, #tpu.memory_space<vmem>>, %arg8: memref<64x32xf32, #tpu.memory_space<vmem>>, %arg9: memref<1x32xf32, #tpu.memory_space<vmem>>, %arg10: memref<1x32xf32, #tpu.memory_space<vmem>>, %arg11: memref<1x32xf32, #tpu.memory_space<vmem>>, %arg12: memref<1x8x32xf32, #tpu.memory_space<vmem>>, %arg13: memref<1x28x32xf32, #tpu.memory_space<vmem>>) attributes {dimension_semantics = [#tpu.dimension_semantics<parallel>], iteration_bounds = array<i64: 2>, scalar_prefetch = 0 : i64, scratch_operands = 1 : i64, tpu.core_type = #tpu.core_type<tc>, window_params = [{transform_indices = @transform_0, window_bounds = array<i64: 1, 32, 32>}, {pipeline_mode = #tpu.pipeline_mode<synchronous>, transform_indices = @transform_1, window_bounds = array<i64: 32, 96>}, {pipeline_mode = #tpu.pipeline_mode<synchronous>, transform_indices = @transform_2, window_bounds = array<i64: 1, 96>}, {pipeline_mode = #tpu.pipeline_mode<synchronous>, transform_indices = @transform_3, window_bounds = array<i64: 32, 32>}, {pipeline_mode = #tpu.pipeline_mode<synchronous>, transform_indices = @transform_4, window_bounds = array<i64: 1, 32>}, {pipeline_mode = #tpu.pipeline_mode<synchronous>, transform_indices = @transform_5, window_bounds = array<i64: 32, 64>}, {pipeline_mode = #tpu.pipeline_mode<synchronous>, transform_indices = @transform_6, window_bounds = array<i64: 1, 64>}, {pipeline_mode = #tpu.pipeline_mode<synchronous>, transform_indices = @transform_7, window_bounds = array<i64: 64, 32>}, {pipeline_mode = #tpu.pipeline_mode<synchronous>, transform_indices = @transform_8, window_bounds = array<i64: 1, 32>}, {pipeline_mode = #tpu.pipeline_mode<synchronous>, transform_indices = @transform_9, window_bounds = array<i64: 1, 32>}, {pipeline_mode = #tpu.pipeline_mode<synchronous>, transform_indices = @transform_10, window_bounds = array<i64: 1, 32>}, {transform_indices = @transform_11, window_bounds = array<i64: 1, 8, 32>}]} {
    %c0 = arith.constant 0 : index
    %c0_0 = arith.constant 0 : index
    %c0_1 = arith.constant 0 : index
    %0 = vector.load %arg1[%c0, %c0_0, %c0_1] : memref<1x32x32xf32, #tpu.memory_space<vmem>>, vector<1x28x32xf32>
    %c0_2 = arith.constant 0 : index
    %c1 = arith.constant 1 : index
    %c0_3 = arith.constant 0 : index
    %1 = vector.load %arg1[%c0_2, %c1, %c0_3] : memref<1x32x32xf32, #tpu.memory_space<vmem>>, vector<1x28x32xf32>
    %2 = arith.addf %0, %1 : vector<1x28x32xf32>
    %c0_4 = arith.constant 0 : index
    %c2 = arith.constant 2 : index
    %c0_5 = arith.constant 0 : index
    %3 = vector.load %arg1[%c0_4, %c2, %c0_5] : memref<1x32x32xf32, #tpu.memory_space<vmem>>, vector<1x28x32xf32>
    %4 = arith.addf %2, %3 : vector<1x28x32xf32>
    %c0_6 = arith.constant 0 : index
    %c3 = arith.constant 3 : index
    %c0_7 = arith.constant 0 : index
    %5 = vector.load %arg1[%c0_6, %c3, %c0_7] : memref<1x32x32xf32, #tpu.memory_space<vmem>>, vector<1x28x32xf32>
    %6 = arith.addf %4, %5 : vector<1x28x32xf32>
    %c0_8 = arith.constant 0 : index
    %c4 = arith.constant 4 : index
    %c0_9 = arith.constant 0 : index
    %7 = vector.load %arg1[%c0_8, %c4, %c0_9] : memref<1x32x32xf32, #tpu.memory_space<vmem>>, vector<1x28x32xf32>
    %8 = arith.addf %6, %7 : vector<1x28x32xf32>
    %c0_10 = arith.constant 0 : index
    %c0_11 = arith.constant 0 : index
    %c0_12 = arith.constant 0 : index
    %9 = vector.load %arg13[%c0_10, %c0_11, %c0_12] : memref<1x28x32xf32, #tpu.memory_space<vmem>>, vector<1x28x32xf32>
    tpu.vector_store %arg13[%c0_10, %c0_11, %c0_12], %8 {strides = array<i32>} : memref<1x28x32xf32, #tpu.memory_space<vmem>>, vector<1x28x32xf32>,
    %c0_13 = arith.constant 0 : index
    %c0_14 = arith.constant 0 : index
    %c0_15 = arith.constant 0 : index
    %10 = vector.load %arg13[%c0_13, %c0_14, %c0_15] : memref<1x28x32xf32, #tpu.memory_space<vmem>>, vector<1x8x32xf32>
    %c0_16 = arith.constant 0 : index
    %c5 = arith.constant 5 : index
    %c0_17 = arith.constant 0 : index
    %11 = vector.load %arg13[%c0_16, %c5, %c0_17] : memref<1x28x32xf32, #tpu.memory_space<vmem>>, vector<1x8x32xf32>
    %12 = arith.addf %10, %11 : vector<1x8x32xf32>
    %c0_18 = arith.constant 0 : index
    %c10 = arith.constant 10 : index
    %c0_19 = arith.constant 0 : index
    %13 = vector.load %arg13[%c0_18, %c10, %c0_19] : memref<1x28x32xf32, #tpu.memory_space<vmem>>, vector<1x8x32xf32>
    %14 = arith.addf %12, %13 : vector<1x8x32xf32>
    %c0_20 = arith.constant 0 : index
    %c15 = arith.constant 15 : index
    %c0_21 = arith.constant 0 : index
    %15 = vector.load %arg13[%c0_20, %c15, %c0_21] : memref<1x28x32xf32, #tpu.memory_space<vmem>>, vector<1x8x32xf32>
    %16 = arith.addf %14, %15 : vector<1x8x32xf32>
    %c0_22 = arith.constant 0 : index
    %c20 = arith.constant 20 : index
    %c0_23 = arith.constant 0 : index
    %17 = vector.load %arg13[%c0_22, %c20, %c0_23] : memref<1x28x32xf32, #tpu.memory_space<vmem>>, vector<1x8x32xf32>
    %18 = arith.addf %16, %17 : vector<1x8x32xf32>
    %cst = arith.constant 4.000000e-02 : f32
    %19 = vector.broadcast %cst : f32 to vector<1x8x32xf32>
    %20 = arith.mulf %18, %19 : vector<1x8x32xf32>
    %c0_24 = arith.constant 0 : index
    %c12 = arith.constant 12 : index
    %c0_25 = arith.constant 0 : index
    %21 = vector.load %arg1[%c0_24, %c12, %c0_25] : memref<1x32x32xf32, #tpu.memory_space<vmem>>, vector<1x8x32xf32>
    %22 = arith.subf %21, %20 : vector<1x8x32xf32>
    %23 = vector.shape_cast %22 : vector<1x8x32xf32> to vector<8x32xf32>
    %c0_26 = arith.constant 0 : index
    %c0_27 = arith.constant 0 : index
    %24 = vector.load %arg2[%c0_26, %c0_27] : memref<32x96xf32, #tpu.memory_space<vmem>>, vector<32x96xf32>
    %25 = arith.truncf %23 : vector<8x32xf32> to vector<8x32xbf16>
    %26 = arith.truncf %24 : vector<32x96xf32> to vector<32x96xbf16>
    %cst_28 = arith.constant dense<0.000000e+00> : vector<8x96xf32>
    %27 = tpu.matmul %25, %26, %cst_28 {dimension_numbers = #tpu.dot_dimension_numbers<[1], [0], [0], [1], [0, 0, 1, 1], [], []>} : vector<8x32xbf16>, vector<32x96xbf16>, vector<8x96xf32> -> vector<8x96xf32>
    %c0_29 = arith.constant 0 : index
    %c0_30 = arith.constant 0 : index
    %28 = vector.load %arg3[%c0_29, %c0_30] : memref<1x96xf32, #tpu.memory_space<vmem>>, vector<1x96xf32>
    %29 = vector.broadcast %28 : vector<1x96xf32> to vector<8x96xf32>
    %30 = arith.addf %27, %29 : vector<8x96xf32>
    %31 = vector.extract_strided_slice %30 {offsets = [0, 0], sizes = [8, 8], strides = [1, 1]} : vector<8x96xf32> to vector<8x8xf32>
    %32 = vector.shape_cast %31 : vector<8x8xf32> to vector<1x8x8xf32>
    %33 = vector.extract_strided_slice %30 {offsets = [0, 32], sizes = [8, 8], strides = [1, 1]} : vector<8x96xf32> to vector<8x8xf32>
    %34 = vector.shape_cast %33 : vector<8x8xf32> to vector<1x8x8xf32>
    %35 = vector.extract_strided_slice %30 {offsets = [0, 64], sizes = [8, 8], strides = [1, 1]} : vector<8x96xf32> to vector<8x8xf32>
    %36 = vector.shape_cast %35 : vector<8x8xf32> to vector<1x8x8xf32>
    %37 = arith.truncf %32 : vector<1x8x8xf32> to vector<1x8x8xbf16>
    %38 = arith.truncf %34 : vector<1x8x8xf32> to vector<1x8x8xbf16>
    "tpu.trace_start"() <{level = 10 : i32, message = "bqd,bkd->bqk"}> : () -> ()
    %cst_31 = arith.constant dense<0.000000e+00> : vector<1x8x8xf32>
    %39 = tpu.matmul %37, %38, %cst_31 {dimension_numbers = #tpu.dot_dimension_numbers<[2], [2], [1], [1], [0, 0, 0, 1, 1, 1], [0], [0]>} : vector<1x8x8xbf16>, vector<1x8x8xbf16>, vector<1x8x8xf32> -> vector<1x8x8xf32>
    "tpu.trace_stop"() : () -> ()
    %cst_32 = arith.constant dense<0xFF800000> : vector<1x8xf32>
    %40 = vector.multi_reduction <maximumf>, %39, %cst_32 [2] : vector<1x8x8xf32> to vector<1x8xf32>
    %41 = vector.shape_cast %40 : vector<1x8xf32> to vector<1x8x1xf32>
    %42 = vector.broadcast %41 : vector<1x8x1xf32> to vector<1x8x8xf32>
    %43 = arith.subf %39, %42 : vector<1x8x8xf32>
    %44 = math.exp %43 : vector<1x8x8xf32>
    %cst_33 = arith.constant dense<0.000000e+00> : vector<1x8xf32>
    %45 = vector.multi_reduction <add>, %44, %cst_33 [2] : vector<1x8x8xf32> to vector<1x8xf32>
    %46 = vector.shape_cast %45 : vector<1x8xf32> to vector<1x8x1xf32>
    %47 = tpu.reciprocal %46 {approx = true} : vector<1x8x1xf32> -> vector<1x8x1xf32>
    %48 = vector.broadcast %47 : vector<1x8x1xf32> to vector<1x8x8xf32>
    %49 = arith.mulf %44, %48 : vector<1x8x8xf32>
    %50 = arith.truncf %49 : vector<1x8x8xf32> to vector<1x8x8xbf16>
    %51 = arith.truncf %36 : vector<1x8x8xf32> to vector<1x8x8xbf16>
    "tpu.trace_start"() <{level = 10 : i32, message = "bqk,bkd->bqd"}> : () -> ()
    %cst_34 = arith.constant dense<0.000000e+00> : vector<1x8x8xf32>
    %52 = tpu.matmul %50, %51, %cst_34 {dimension_numbers = #tpu.dot_dimension_numbers<[2], [1], [1], [2], [0, 0, 0, 1, 1, 2], [0], [0]>} : vector<1x8x8xbf16>, vector<1x8x8xbf16>, vector<1x8x8xf32> -> vector<1x8x8xf32>
    "tpu.trace_stop"() : () -> ()
    %53 = vector.extract_strided_slice %30 {offsets = [0, 8], sizes = [8, 8], strides = [1, 1]} : vector<8x96xf32> to vector<8x8xf32>
    %54 = vector.shape_cast %53 : vector<8x8xf32> to vector<1x8x8xf32>
    %55 = vector.extract_strided_slice %30 {offsets = [0, 40], sizes = [8, 8], strides = [1, 1]} : vector<8x96xf32> to vector<8x8xf32>
    %56 = vector.shape_cast %55 : vector<8x8xf32> to vector<1x8x8xf32>
    %57 = vector.extract_strided_slice %30 {offsets = [0, 72], sizes = [8, 8], strides = [1, 1]} : vector<8x96xf32> to vector<8x8xf32>
    %58 = vector.shape_cast %57 : vector<8x8xf32> to vector<1x8x8xf32>
    %59 = arith.truncf %54 : vector<1x8x8xf32> to vector<1x8x8xbf16>
    %60 = arith.truncf %56 : vector<1x8x8xf32> to vector<1x8x8xbf16>
    "tpu.trace_start"() <{level = 10 : i32, message = "bqd,bkd->bqk"}> : () -> ()
    %cst_35 = arith.constant dense<0.000000e+00> : vector<1x8x8xf32>
    %61 = tpu.matmul %59, %60, %cst_35 {dimension_numbers = #tpu.dot_dimension_numbers<[2], [2], [1], [1], [0, 0, 0, 1, 1, 1], [0], [0]>} : vector<1x8x8xbf16>, vector<1x8x8xbf16>, vector<1x8x8xf32> -> vector<1x8x8xf32>
    "tpu.trace_stop"() : () -> ()
    %cst_36 = arith.constant dense<0xFF800000> : vector<1x8xf32>
    %62 = vector.multi_reduction <maximumf>, %61, %cst_36 [2] : vector<1x8x8xf32> to vector<1x8xf32>
    %63 = vector.shape_cast %62 : vector<1x8xf32> to vector<1x8x1xf32>
    %64 = vector.broadcast %63 : vector<1x8x1xf32> to vector<1x8x8xf32>
    %65 = arith.subf %61, %64 : vector<1x8x8xf32>
    %66 = math.exp %65 : vector<1x8x8xf32>
    %cst_37 = arith.constant dense<0.000000e+00> : vector<1x8xf32>
    %67 = vector.multi_reduction <add>, %66, %cst_37 [2] : vector<1x8x8xf32> to vector<1x8xf32>
    %68 = vector.shape_cast %67 : vector<1x8xf32> to vector<1x8x1xf32>
    %69 = tpu.reciprocal %68 {approx = true} : vector<1x8x1xf32> -> vector<1x8x1xf32>
    %70 = vector.broadcast %69 : vector<1x8x1xf32> to vector<1x8x8xf32>
    %71 = arith.mulf %66, %70 : vector<1x8x8xf32>
    %72 = arith.truncf %71 : vector<1x8x8xf32> to vector<1x8x8xbf16>
    %73 = arith.truncf %58 : vector<1x8x8xf32> to vector<1x8x8xbf16>
    "tpu.trace_start"() <{level = 10 : i32, message = "bqk,bkd->bqd"}> : () -> ()
    %cst_38 = arith.constant dense<0.000000e+00> : vector<1x8x8xf32>
    %74 = tpu.matmul %72, %73, %cst_38 {dimension_numbers = #tpu.dot_dimension_numbers<[2], [1], [1], [2], [0, 0, 0, 1, 1, 2], [0], [0]>} : vector<1x8x8xbf16>, vector<1x8x8xbf16>, vector<1x8x8xf32> -> vector<1x8x8xf32>
    "tpu.trace_stop"() : () -> ()
    %75 = vector.extract_strided_slice %30 {offsets = [0, 16], sizes = [8, 8], strides = [1, 1]} : vector<8x96xf32> to vector<8x8xf32>
    %76 = vector.shape_cast %75 : vector<8x8xf32> to vector<1x8x8xf32>
    %77 = vector.extract_strided_slice %30 {offsets = [0, 48], sizes = [8, 8], strides = [1, 1]} : vector<8x96xf32> to vector<8x8xf32>
    %78 = vector.shape_cast %77 : vector<8x8xf32> to vector<1x8x8xf32>
    %79 = vector.extract_strided_slice %30 {offsets = [0, 80], sizes = [8, 8], strides = [1, 1]} : vector<8x96xf32> to vector<8x8xf32>
    %80 = vector.shape_cast %79 : vector<8x8xf32> to vector<1x8x8xf32>
    %81 = arith.truncf %76 : vector<1x8x8xf32> to vector<1x8x8xbf16>
    %82 = arith.truncf %78 : vector<1x8x8xf32> to vector<1x8x8xbf16>
    "tpu.trace_start"() <{level = 10 : i32, message = "bqd,bkd->bqk"}> : () -> ()
    %cst_39 = arith.constant dense<0.000000e+00> : vector<1x8x8xf32>
    %83 = tpu.matmul %81, %82, %cst_39 {dimension_numbers = #tpu.dot_dimension_numbers<[2], [2], [1], [1], [0, 0, 0, 1, 1, 1], [0], [0]>} : vector<1x8x8xbf16>, vector<1x8x8xbf16>, vector<1x8x8xf32> -> vector<1x8x8xf32>
    "tpu.trace_stop"() : () -> ()
    %cst_40 = arith.constant dense<0xFF800000> : vector<1x8xf32>
    %84 = vector.multi_reduction <maximumf>, %83, %cst_40 [2] : vector<1x8x8xf32> to vector<1x8xf32>
    %85 = vector.shape_cast %84 : vector<1x8xf32> to vector<1x8x1xf32>
    %86 = vector.broadcast %85 : vector<1x8x1xf32> to vector<1x8x8xf32>
    %87 = arith.subf %83, %86 : vector<1x8x8xf32>
    %88 = math.exp %87 : vector<1x8x8xf32>
    %cst_41 = arith.constant dense<0.000000e+00> : vector<1x8xf32>
    %89 = vector.multi_reduction <add>, %88, %cst_41 [2] : vector<1x8x8xf32> to vector<1x8xf32>
    %90 = vector.shape_cast %89 : vector<1x8xf32> to vector<1x8x1xf32>
    %91 = tpu.reciprocal %90 {approx = true} : vector<1x8x1xf32> -> vector<1x8x1xf32>
    %92 = vector.broadcast %91 : vector<1x8x1xf32> to vector<1x8x8xf32>
    %93 = arith.mulf %88, %92 : vector<1x8x8xf32>
    %94 = arith.truncf %93 : vector<1x8x8xf32> to vector<1x8x8xbf16>
    %95 = arith.truncf %80 : vector<1x8x8xf32> to vector<1x8x8xbf16>
    "tpu.trace_start"() <{level = 10 : i32, message = "bqk,bkd->bqd"}> : () -> ()
    %cst_42 = arith.constant dense<0.000000e+00> : vector<1x8x8xf32>
    %96 = tpu.matmul %94, %95, %cst_42 {dimension_numbers = #tpu.dot_dimension_numbers<[2], [1], [1], [2], [0, 0, 0, 1, 1, 2], [0], [0]>} : vector<1x8x8xbf16>, vector<1x8x8xbf16>, vector<1x8x8xf32> -> vector<1x8x8xf32>
    "tpu.trace_stop"() : () -> ()
    %97 = vector.extract_strided_slice %30 {offsets = [0, 24], sizes = [8, 8], strides = [1, 1]} : vector<8x96xf32> to vector<8x8xf32>
    %98 = vector.shape_cast %97 : vector<8x8xf32> to vector<1x8x8xf32>
    %99 = vector.extract_strided_slice %30 {offsets = [0, 56], sizes = [8, 8], strides = [1, 1]} : vector<8x96xf32> to vector<8x8xf32>
    %100 = vector.shape_cast %99 : vector<8x8xf32> to vector<1x8x8xf32>
    %101 = vector.extract_strided_slice %30 {offsets = [0, 88], sizes = [8, 8], strides = [1, 1]} : vector<8x96xf32> to vector<8x8xf32>
    %102 = vector.shape_cast %101 : vector<8x8xf32> to vector<1x8x8xf32>
    %103 = arith.truncf %98 : vector<1x8x8xf32> to vector<1x8x8xbf16>
    %104 = arith.truncf %100 : vector<1x8x8xf32> to vector<1x8x8xbf16>
    "tpu.trace_start"() <{level = 10 : i32, message = "bqd,bkd->bqk"}> : () -> ()
    %cst_43 = arith.constant dense<0.000000e+00> : vector<1x8x8xf32>
    %105 = tpu.matmul %103, %104, %cst_43 {dimension_numbers = #tpu.dot_dimension_numbers<[2], [2], [1], [1], [0, 0, 0, 1, 1, 1], [0], [0]>} : vector<1x8x8xbf16>, vector<1x8x8xbf16>, vector<1x8x8xf32> -> vector<1x8x8xf32>
    "tpu.trace_stop"() : () -> ()
    %cst_44 = arith.constant dense<0xFF800000> : vector<1x8xf32>
    %106 = vector.multi_reduction <maximumf>, %105, %cst_44 [2] : vector<1x8x8xf32> to vector<1x8xf32>
    %107 = vector.shape_cast %106 : vector<1x8xf32> to vector<1x8x1xf32>
    %108 = vector.broadcast %107 : vector<1x8x1xf32> to vector<1x8x8xf32>
    %109 = arith.subf %105, %108 : vector<1x8x8xf32>
    %110 = math.exp %109 : vector<1x8x8xf32>
    %cst_45 = arith.constant dense<0.000000e+00> : vector<1x8xf32>
    %111 = vector.multi_reduction <add>, %110, %cst_45 [2] : vector<1x8x8xf32> to vector<1x8xf32>
    %112 = vector.shape_cast %111 : vector<1x8xf32> to vector<1x8x1xf32>
    %113 = tpu.reciprocal %112 {approx = true} : vector<1x8x1xf32> -> vector<1x8x1xf32>
    %114 = vector.broadcast %113 : vector<1x8x1xf32> to vector<1x8x8xf32>
    %115 = arith.mulf %110, %114 : vector<1x8x8xf32>
    %116 = arith.truncf %115 : vector<1x8x8xf32> to vector<1x8x8xbf16>
    %117 = arith.truncf %102 : vector<1x8x8xf32> to vector<1x8x8xbf16>
    "tpu.trace_start"() <{level = 10 : i32, message = "bqk,bkd->bqd"}> : () -> ()
    %cst_46 = arith.constant dense<0.000000e+00> : vector<1x8x8xf32>
    %118 = tpu.matmul %116, %117, %cst_46 {dimension_numbers = #tpu.dot_dimension_numbers<[2], [1], [1], [2], [0, 0, 0, 1, 1, 2], [0], [0]>} : vector<1x8x8xbf16>, vector<1x8x8xbf16>, vector<1x8x8xf32> -> vector<1x8x8xf32>
    "tpu.trace_stop"() : () -> ()
    %119 = tpu.concatenate %52, %74, %96, %118 in 2 : vector<1x8x8xf32>, vector<1x8x8xf32>, vector<1x8x8xf32>, vector<1x8x8xf32> -> vector<1x8x32xf32>
    %120 = vector.shape_cast %119 : vector<1x8x32xf32> to vector<8x32xf32>
    %c0_47 = arith.constant 0 : index
    %c0_48 = arith.constant 0 : index
    %121 = vector.load %arg4[%c0_47, %c0_48] : memref<32x32xf32, #tpu.memory_space<vmem>>, vector<32x32xf32>
    %122 = arith.truncf %120 : vector<8x32xf32> to vector<8x32xbf16>
    %123 = arith.truncf %121 : vector<32x32xf32> to vector<32x32xbf16>
    %cst_49 = arith.constant dense<0.000000e+00> : vector<8x32xf32>
    %124 = tpu.matmul %122, %123, %cst_49 {dimension_numbers = #tpu.dot_dimension_numbers<[1], [0], [0], [1], [0, 0, 1, 1], [], []>} : vector<8x32xbf16>, vector<32x32xbf16>, vector<8x32xf32> -> vector<8x32xf32>
    %c0_50 = arith.constant 0 : index
    %c0_51 = arith.constant 0 : index
    %125 = vector.load %arg5[%c0_50, %c0_51] : memref<1x32xf32, #tpu.memory_space<vmem>>, vector<1x32xf32>
    %126 = vector.broadcast %125 : vector<1x32xf32> to vector<8x32xf32>
    %127 = arith.addf %124, %126 : vector<8x32xf32>
    %c0_52 = arith.constant 0 : index
    %c0_53 = arith.constant 0 : index
    %128 = vector.load %arg10[%c0_52, %c0_53] : memref<1x32xf32, #tpu.memory_space<vmem>>, vector<1x32xf32>
    %c0_54 = arith.constant 0 : index
    %c0_55 = arith.constant 0 : index
    %129 = vector.load %arg11[%c0_54, %c0_55] : memref<1x32xf32, #tpu.memory_space<vmem>>, vector<1x32xf32>
    %130 = arith.addf %23, %127 : vector<8x32xf32>
    %cst_56 = arith.constant dense<0.000000e+00> : vector<8xf32>
    %131 = vector.multi_reduction <add>, %130, %cst_56 [1] : vector<8x32xf32> to vector<8xf32>
    %132 = vector.shape_cast %131 : vector<8xf32> to vector<8x1xf32>
    %cst_57 = arith.constant 3.125000e-02 : f32
    %133 = vector.broadcast %cst_57 : f32 to vector<8x1xf32>
    %134 = arith.mulf %132, %133 : vector<8x1xf32>
    %135 = vector.broadcast %134 : vector<8x1xf32> to vector<8x32xf32>
    %136 = arith.subf %130, %135 : vector<8x32xf32>
    %137 = arith.mulf %136, %136 : vector<8x32xf32>
    %cst_58 = arith.constant dense<0.000000e+00> : vector<8xf32>
    %138 = vector.multi_reduction <add>, %137, %cst_58 [1] : vector<8x32xf32> to vector<8xf32>
    %139 = vector.shape_cast %138 : vector<8xf32> to vector<8x1xf32>
    %cst_59 = arith.constant 3.125000e-02 : f32
    %140 = vector.broadcast %cst_59 : f32 to vector<8x1xf32>
    %141 = arith.mulf %139, %140 : vector<8x1xf32>
    %cst_60 = arith.constant 9.99999974E-6 : f32
    %142 = vector.broadcast %cst_60 : f32 to vector<8x1xf32>
    %143 = arith.addf %141, %142 : vector<8x1xf32>
    %144 = math.rsqrt %143 : vector<8x1xf32>
    %145 = vector.broadcast %144 : vector<8x1xf32> to vector<8x32xf32>
    %146 = arith.mulf %136, %145 : vector<8x32xf32>
    %147 = vector.broadcast %128 : vector<1x32xf32> to vector<8x32xf32>
    %148 = arith.mulf %146, %147 : vector<8x32xf32>
    %149 = vector.broadcast %129 : vector<1x32xf32> to vector<8x32xf32>
    %150 = arith.addf %148, %149 : vector<8x32xf32>
    %c0_61 = arith.constant 0 : index
    %c0_62 = arith.constant 0 : index
    %151 = vector.load %arg6[%c0_61, %c0_62] : memref<32x64xf32, #tpu.memory_space<vmem>>, vector<32x64xf32>
    %152 = arith.truncf %150 : vector<8x32xf32> to vector<8x32xbf16>
    %153 = arith.truncf %151 : vector<32x64xf32> to vector<32x64xbf16>
    %cst_63 = arith.constant dense<0.000000e+00> : vector<8x64xf32>
    %154 = tpu.matmul %152, %153, %cst_63 {dimension_numbers = #tpu.dot_dimension_numbers<[1], [0], [0], [1], [0, 0, 1, 1], [], []>} : vector<8x32xbf16>, vector<32x64xbf16>, vector<8x64xf32> -> vector<8x64xf32>
    %c0_64 = arith.constant 0 : index
    %c0_65 = arith.constant 0 : index
    %155 = vector.load %arg7[%c0_64, %c0_65] : memref<1x64xf32, #tpu.memory_space<vmem>>, vector<1x64xf32>
    %156 = vector.broadcast %155 : vector<1x64xf32> to vector<8x64xf32>
    %157 = arith.addf %154, %156 : vector<8x64xf32>
    %cst_66 = arith.constant 0.000000e+00 : f32
    %158 = vector.broadcast %cst_66 : f32 to vector<8x64xf32>
    %159 = arith.maximumf %157, %158 : vector<8x64xf32>
    %c0_67 = arith.constant 0 : index
    %c0_68 = arith.constant 0 : index
    %160 = vector.load %arg8[%c0_67, %c0_68] : memref<64x32xf32, #tpu.memory_space<vmem>>, vector<64x32xf32>
    %161 = arith.truncf %159 : vector<8x64xf32> to vector<8x64xbf16>
    %162 = arith.truncf %160 : vector<64x32xf32> to vector<64x32xbf16>
    %cst_69 = arith.constant dense<0.000000e+00> : vector<8x32xf32>
    %163 = tpu.matmul %161, %162, %cst_69 {dimension_numbers = #tpu.dot_dimension_numbers<[1], [0], [0], [1], [0, 0, 1, 1], [], []>} : vector<8x64xbf16>, vector<64x32xbf16>, vector<8x32xf32> -> vector<8x32xf32>
    %c0_70 = arith.constant 0 : index
    %c0_71 = arith.constant 0 : index
    %164 = vector.load %arg9[%c0_70, %c0_71] : memref<1x32xf32, #tpu.memory_space<vmem>>, vector<1x32xf32>
    %165 = vector.broadcast %164 : vector<1x32xf32> to vector<8x32xf32>
    %166 = arith.addf %163, %165 : vector<8x32xf32>
    %167 = arith.addf %150, %166 : vector<8x32xf32>
    %cst_72 = arith.constant dense<0.000000e+00> : vector<8xf32>
    %168 = vector.multi_reduction <add>, %167, %cst_72 [1] : vector<8x32xf32> to vector<8xf32>
    %169 = vector.shape_cast %168 : vector<8xf32> to vector<8x1xf32>
    %cst_73 = arith.constant 3.125000e-02 : f32
    %170 = vector.broadcast %cst_73 : f32 to vector<8x1xf32>
    %171 = arith.mulf %169, %170 : vector<8x1xf32>
    %172 = vector.broadcast %171 : vector<8x1xf32> to vector<8x32xf32>
    %173 = arith.subf %167, %172 : vector<8x32xf32>
    %174 = arith.mulf %173, %173 : vector<8x32xf32>
    %cst_74 = arith.constant dense<0.000000e+00> : vector<8xf32>
    %175 = vector.multi_reduction <add>, %174, %cst_74 [1] : vector<8x32xf32> to vector<8xf32>
    %176 = vector.shape_cast %175 : vector<8xf32> to vector<8x1xf32>
    %cst_75 = arith.constant 3.125000e-02 : f32
    %177 = vector.broadcast %cst_75 : f32 to vector<8x1xf32>
    %178 = arith.mulf %176, %177 : vector<8x1xf32>
    %cst_76 = arith.constant 9.99999974E-6 : f32
    %179 = vector.broadcast %cst_76 : f32 to vector<8x1xf32>
    %180 = arith.addf %178, %179 : vector<8x1xf32>
    %181 = math.rsqrt %180 : vector<8x1xf32>
    %182 = vector.broadcast %181 : vector<8x1xf32> to vector<8x32xf32>
    %183 = arith.mulf %173, %182 : vector<8x32xf32>
    %184 = vector.broadcast %128 : vector<1x32xf32> to vector<8x32xf32>
    %185 = arith.mulf %183, %184 : vector<8x32xf32>
    %186 = vector.broadcast %129 : vector<1x32xf32> to vector<8x32xf32>
    %187 = arith.addf %185, %186 : vector<8x32xf32>
    %188 = vector.shape_cast %187 : vector<8x32xf32> to vector<1x8x32xf32>
    %189 = arith.addf %188, %20 : vector<1x8x32xf32>
    %c0_77 = arith.constant 0 : index
    %c0_78 = arith.constant 0 : index
    %c0_79 = arith.constant 0 : index
    %190 = vector.load %arg12[%c0_77, %c0_78, %c0_79] : memref<1x8x32xf32, #tpu.memory_space<vmem>>, vector<1x8x32xf32>
    tpu.vector_store %arg12[%c0_77, %c0_78, %c0_79], %189 {strides = array<i32>} : memref<1x8x32xf32, #tpu.memory_space<vmem>>, vector<1x8x32xf32>,
    return
  }
  func.func @transform_0(%arg0: i32) -> (i32, i32, i32) {
    %c0_i32 = arith.constant 0 : i32
    %c0_i32_0 = arith.constant 0 : i32
    %c0_i32_1 = arith.constant 0 : i32
    return %arg0, %c0_i32, %c0_i32_0 : i32, i32, i32
  }
  func.func @transform_1(%arg0: i32) -> (i32, i32) {
    %c0_i32 = arith.constant 0 : i32
    %c0_i32_0 = arith.constant 0 : i32
    %c0_i32_1 = arith.constant 0 : i32
    return %c0_i32, %c0_i32_0 : i32, i32
  }
  func.func @transform_2(%arg0: i32) -> (i32, i32) {
    %c0_i32 = arith.constant 0 : i32
    %c0_i32_0 = arith.constant 0 : i32
    %c0_i32_1 = arith.constant 0 : i32
    return %c0_i32, %c0_i32_0 : i32, i32
  }
  func.func @transform_3(%arg0: i32) -> (i32, i32) {
    %c0_i32 = arith.constant 0 : i32
    %c0_i32_0 = arith.constant 0 : i32
    %c0_i32_1 = arith.constant 0 : i32
    return %c0_i32, %c0_i32_0 : i32, i32
  }
  func.func @transform_4(%arg0: i32) -> (i32, i32) {
    %c0_i32 = arith.constant 0 : i32
    %c0_i32_0 = arith.constant 0 : i32
    %c0_i32_1 = arith.constant 0 : i32
    return %c0_i32, %c0_i32_0 : i32, i32
  }
  func.func @transform_5(%arg0: i32) -> (i32, i32) {
    %c0_i32 = arith.constant 0 : i32
    %c0_i32_0 = arith.constant 0 : i32
    %c0_i32_1 = arith.constant 0 : i32
    return %c0_i32, %c0_i32_0 : i32, i32
  }
  func.func @transform_6(%arg0: i32) -> (i32, i32) {
    %c0_i32 = arith.constant 0 : i32
    %c0_i32_0 = arith.constant 0 : i32
    %c0_i32_1 = arith.constant 0 : i32
    return %c0_i32, %c0_i32_0 : i32, i32
  }
  func.func @transform_7(%arg0: i32) -> (i32, i32) {
    %c0_i32 = arith.constant 0 : i32
    %c0_i32_0 = arith.constant 0 : i32
    %c0_i32_1 = arith.constant 0 : i32
    return %c0_i32, %c0_i32_0 : i32, i32
  }
  func.func @transform_8(%arg0: i32) -> (i32, i32) {
    %c0_i32 = arith.constant 0 : i32
    %c0_i32_0 = arith.constant 0 : i32
    %c0_i32_1 = arith.constant 0 : i32
    return %c0_i32, %c0_i32_0 : i32, i32
  }
  func.func @transform_9(%arg0: i32) -> (i32, i32) {
    %c0_i32 = arith.constant 0 : i32
    %c0_i32_0 = arith.constant 0 : i32
    %c0_i32_1 = arith.constant 0 : i32
    return %c0_i32, %c0_i32_0 : i32, i32
  }
  func.func @transform_10(%arg0: i32) -> (i32, i32) {
    %c0_i32 = arith.constant 0 : i32
    %c0_i32_0 = arith.constant 0 : i32
    %c0_i32_1 = arith.constant 0 : i32
    return %c0_i32, %c0_i32_0 : i32, i32
  }
  func.func @transform_11(%arg0: i32) -> (i32, i32, i32) {
    %c0_i32 = arith.constant 0 : i32
    %c0_i32_0 = arith.constant 0 : i32
    %c0_i32_1 = arith.constant 0 : i32
    return %arg0, %c0_i32, %c0_i32_0 : i32, i32, i32
  }
}

</mosaic_0001>

<llo_original>
// kernel: tpu_custom_call.1
$region0: #{tpu_custom_call.1}
  #allocation0 [shape = 'u32[]', space=smem, size = 0x4, offset = 0x4, fixed_abs, tag = 'smem constant byte address 0x4 - core index']
  #allocation1 [shape = 'u32[144,128]{1,0:T(1,128)}', space=vmem, size = 0x12000, scoped, tag = 'internal scratch']
  #allocation2 [shape = 'f32[1,28,32]{2,1,0:T(8,128)}', space=vmem, size = 0x4000, scoped, tag = 'scratch operand']
  %s0 = inlined_call_operand.vmem [shape: f32[2,32,32], index: 0, kind: input, shape index: {}]
  %s1 = inlined_call_operand.vmem [shape: f32[32,96], index: 1, kind: input, shape index: {}]
  %s2 = inlined_call_operand.vmem [shape: f32[1,96], index: 2, kind: input, shape index: {}]
  %s3 = inlined_call_operand.hbm [shape: f32[32,32], index: 3, kind: input, shape index: {}]
  %s4 = inlined_call_operand.vmem [shape: f32[1,32], index: 4, kind: input, shape index: {}]
  %s5 = inlined_call_operand.hbm [shape: f32[32,64], index: 5, kind: input, shape index: {}]
  %s6 = inlined_call_operand.vmem [shape: f32[1,64], index: 6, kind: input, shape index: {}]
  %s7 = inlined_call_operand.vmem [shape: f32[64,32], index: 7, kind: input, shape index: {}]
  %s8 = inlined_call_operand.vmem [shape: f32[1,32], index: 8, kind: input, shape index: {}]
  %s9 = inlined_call_operand.vmem [shape: f32[1,32], index: 9, kind: input, shape index: {}]
  %s10 = inlined_call_operand.vmem [shape: f32[1,32], index: 10, kind: input, shape index: {}]
  %s11 = inlined_call_operand.hbm [shape: f32[2,8,32], index: 11, kind: output, shape index: {}]
  %s12 = sld [smem:[#allocation0]]
  $region85: #{tpu_custom_call.1} parent=0
    _
  %s14 = ssub.s32 1, %s12
  %s15 = scalar_select 0, %s14, %s12
  $region1: #{tpu_custom_call.1} parent=0
    #allocation3 [shape = 'u8[16384]{0}', space=vmem, size = 0x4000, scoped, tag = 'input window, operand 3, single buffered']
    #allocation4 [shape = 's32[2]{0}', space=sflag, size = 0x8, scoped, tag = 'scoped memory for tpu_custom_call.1']
    #allocation5 [shape = 's32[2]{0}', space=sflag, size = 0x8, scoped, tag = 'scoped memory for tpu_custom_call.1']
    #allocation6 [shape = 'u8[16384]{0}', space=vmem, size = 0x4000, scoped, tag = 'input window, operand 5, single buffered']
    #allocation7 [shape = 's32[1]{0}', space=sflag, size = 0x4, scoped, tag = 'scoped memory for tpu_custom_call.1']
    #allocation8 [shape = 'u8[8192]{0}', space=vmem, size = 0x2000, scoped, tag = 'output window, operand 0']
    %16 = vsyncpa [#allocation4], 0
    %17 = vsyncpa [#allocation7], 0
    %18 = vsyncpa [#allocation5], 0
    %s19 = scalar_lea.sflag [#allocation5], 1
    %20 = vsyncpa %s19, 0
    loop: start=0, step=1, limit=4
    $region2: #{tpu_custom_call.1} parent=1 // loop_pre_header
      _
    $region3: #{tpu_custom_call.1} parent=1 // loop_header
      %s22 = sphi 0, %s26
      %p23 = scmp.ge.s32.totalorder %s22, 4
      %s32 = sphi 0, %s34
      %s35 = sphi 0, %s32
      %s36 = sphi 0, %s35
      %s52 = sphi 0, %s36
      %s56 = sphi 0, %s56
      %s58 = sphi 0, %s56
      %s59 = sphi 0, %s58
      %s73 = sphi 0, %s59
      %s77 = sphi 0, %s77
      %s79 = sphi 0, %s77
      %s80 = sphi 0, %s79
      %s94 = sphi 0, %s80
      %s98 = sphi 0, %s98
      %s100 = sphi 0, %s98
      %s101 = sphi 0, %s100
      %s115 = sphi 0, %s101
      %s119 = sphi 0, %s119
      %s121 = sphi 0, %s119
      %s122 = sphi 0, %s121
      %s136 = sphi 0, %s122
      %s140 = sphi 0, %s140
      %s142 = sphi 0, %s140
      %s143 = sphi 0, %s142
      %s157 = sphi 0, %s143
      %s161 = sphi 0, %s161
      %s163 = sphi 0, %s161
      %s164 = sphi 0, %s163
      %s178 = sphi 0, %s164
      %s182 = sphi 0, %s182
      %s184 = sphi 0, %s182
      %s185 = sphi 0, %s184
      %s199 = sphi 0, %s185
      %s203 = sphi 0, %s203
      %s205 = sphi 0, %s203
      %s206 = sphi 0, %s205
      %s220 = sphi 0, %s206
      %s224 = sphi 0, %s224
      %s226 = sphi 0, %s224
      %s227 = sphi 0, %s226
      %s241 = sphi 0, %s227
      %s245 = sphi 0, %s245
      %s247 = sphi 0, %s245
      %s248 = sphi 0, %s247
      %s262 = sphi 0, %s248
      %s268 = sphi 0, %s270
      %s271 = sphi 0, %s268
      %s272 = sphi 0, %s271
      %s288 = sphi 0, %s272
    $region4: #{tpu_custom_call.1} parent=1 // loop_header_branch
      %25 = sbr.rel (%p23) target = $region8
    $region5: #{tpu_custom_call.1} parent=1 // loop_body
      %s27 = ssub.s32 %s22, 1
      %s28 = ssub.s32 %s22, 2
      %s29 = sadd.s32 %s22, 1
      %s30 = ssub.s32 %s22, %s29
      %p31 = scmp.eq.s32.totalorder %s30, 0
      %s33 = sadd.s32 %s32, 1
      %s34 = scalar_select %p31, %s32, %s33
      %p37 = pneg %p31
      %p38 = scmp.eq.s32.totalorder %s22, 1
      %p39 = por %p37, %p38
      %p40 = scmp.ne.s32.totalorder %s32, %s35
      %p41 = scmp.eq.s32.totalorder %s22, 0
      %p42 = por %p40, %p41
      %p43 = scmp.ne.s32.totalorder %s32, %s35
      %p44 = scmp.eq.s32.totalorder %s27, 1
      %p45 = por %p43, %p44
      %p46 = scmp.ne.s32.totalorder %s35, %s36
      %p47 = scmp.eq.s32.totalorder %s27, 0
      %p48 = por %p46, %p47
      %p49 = scmp.ne.s32.totalorder %s35, %s36
      %p50 = scmp.eq.s32.totalorder %s28, 1
      %p51 = por %p49, %p50
      %p53 = scmp.ne.s32.totalorder %s36, %s52
      %p54 = scmp.eq.s32.totalorder %s28, 0
      %p55 = por %p53, %p54
      %s57 = sadd.s32 %s56, 1
      %p60 = scmp.eq.s32.totalorder %s22, 1
      %p61 = scmp.ne.s32.totalorder %s56, %s58
      %p62 = scmp.eq.s32.totalorder %s22, 0
      %p63 = por %p61, %p62
      %p64 = scmp.ne.s32.totalorder %s56, %s58
      %p65 = scmp.eq.s32.totalorder %s27, 1
      %p66 = por %p64, %p65
      %p67 = scmp.ne.s32.totalorder %s58, %s59
      %p68 = scmp.eq.s32.totalorder %s27, 0
      %p69 = por %p67, %p68
      %p70 = scmp.ne.s32.totalorder %s58, %s59
      %p71 = scmp.eq.s32.totalorder %s28, 1
      %p72 = por %p70, %p71
      %p74 = scmp.ne.s32.totalorder %s59, %s73
      %p75 = scmp.eq.s32.totalorder %s28, 0
      %p76 = por %p74, %p75
      %s78 = sadd.s32 %s77, 1
      %p81 = scmp.eq.s32.totalorder %s22, 1
      %p82 = scmp.ne.s32.totalorder %s77, %s79
      %p83 = scmp.eq.s32.totalorder %s22, 0
      %p84 = por %p82, %p83
      %p85 = scmp.ne.s32.totalorder %s77, %s79
      %p86 = scmp.eq.s32.totalorder %s27, 1
      %p87 = por %p85, %p86
      %p88 = scmp.ne.s32.totalorder %s79, %s80
      %p89 = scmp.eq.s32.totalorder %s27, 0
      %p90 = por %p88, %p89
      %p91 = scmp.ne.s32.totalorder %s79, %s80
      %p92 = scmp.eq.s32.totalorder %s28, 1
      %p93 = por %p91, %p92
      %p95 = scmp.ne.s32.totalorder %s80, %s94
      %p96 = scmp.eq.s32.totalorder %s28, 0
      %p97 = por %p95, %p96
      %s99 = sadd.s32 %s98, 1
      %p102 = scmp.eq.s32.totalorder %s22, 1
      %p103 = scmp.ne.s32.totalorder %s98, %s100
      %p104 = scmp.eq.s32.totalorder %s22, 0
      %p105 = por %p103, %p104
      %p106 = scmp.ne.s32.totalorder %s98, %s100
      %p107 = scmp.eq.s32.totalorder %s27, 1
      %p108 = por %p106, %p107
      %p109 = scmp.ne.s32.totalorder %s100, %s101
      %p110 = scmp.eq.s32.totalorder %s27, 0
      %p111 = por %p109, %p110
      %p112 = scmp.ne.s32.totalorder %s100, %s101
      %p113 = scmp.eq.s32.totalorder %s28, 1
      %p114 = por %p112, %p113
      %p116 = scmp.ne.s32.totalorder %s101, %s115
      %p117 = scmp.eq.s32.totalorder %s28, 0
      %p118 = por %p116, %p117
      %s120 = sadd.s32 %s119, 1
      %p123 = scmp.eq.s32.totalorder %s22, 1
      %p124 = scmp.ne.s32.totalorder %s119, %s121
      %p125 = scmp.eq.s32.totalorder %s22, 0
      %p126 = por %p124, %p125
      %p127 = scmp.ne.s32.totalorder %s119, %s121
      %p128 = scmp.eq.s32.totalorder %s27, 1
      %p129 = por %p127, %p128
      %p130 = scmp.ne.s32.totalorder %s121, %s122
      %p131 = scmp.eq.s32.totalorder %s27, 0
      %p132 = por %p130, %p131
      %p133 = scmp.ne.s32.totalorder %s121, %s122
      %p134 = scmp.eq.s32.totalorder %s28, 1
      %p135 = por %p133, %p134
      %p137 = scmp.ne.s32.totalorder %s122, %s136
      %p138 = scmp.eq.s32.totalorder %s28, 0
      %p139 = por %p137, %p138
      %s141 = sadd.s32 %s140, 1
      %p144 = scmp.eq.s32.totalorder %s22, 1
      %p145 = scmp.ne.s32.totalorder %s140, %s142
      %p146 = scmp.eq.s32.totalorder %s22, 0
      %p147 = por %p145, %p146
      %p148 = scmp.ne.s32.totalorder %s140, %s142
      %p149 = scmp.eq.s32.totalorder %s27, 1
      %p150 = por %p148, %p149
      %p151 = scmp.ne.s32.totalorder %s142, %s143
      %p152 = scmp.eq.s32.totalorder %s27, 0
      %p153 = por %p151, %p152
      %p154 = scmp.ne.s32.totalorder %s142, %s143
      %p155 = scmp.eq.s32.totalorder %s28, 1
      %p156 = por %p154, %p155
      %p158 = scmp.ne.s32.totalorder %s143, %s157
      %p159 = scmp.eq.s32.totalorder %s28, 0
      %p160 = por %p158, %p159
      %s162 = sadd.s32 %s161, 1
      %p165 = scmp.eq.s32.totalorder %s22, 1
      %p166 = scmp.ne.s32.totalorder %s161, %s163
      %p167 = scmp.eq.s32.totalorder %s22, 0
      %p168 = por %p166, %p167
      %p169 = scmp.ne.s32.totalorder %s161, %s163
      %p170 = scmp.eq.s32.totalorder %s27, 1
      %p171 = por %p169, %p170
      %p172 = scmp.ne.s32.totalorder %s163, %s164
      %p173 = scmp.eq.s32.totalorder %s27, 0
      %p174 = por %p172, %p173
      %p175 = scmp.ne.s32.totalorder %s163, %s164
      %p176 = scmp.eq.s32.totalorder %s28, 1
      %p177 = por %p175, %p176
      %p179 = scmp.ne.s32.totalorder %s164, %s178
      %p180 = scmp.eq.s32.totalorder %s28, 0
      %p181 = por %p179, %p180
      %s183 = sadd.s32 %s182, 1
      %p186 = scmp.eq.s32.totalorder %s22, 1
      %p187 = scmp.ne.s32.totalorder %s182, %s184
      %p188 = scmp.eq.s32.totalorder %s22, 0
      %p189 = por %p187, %p188
      %p190 = scmp.ne.s32.totalorder %s182, %s184
      %p191 = scmp.eq.s32.totalorder %s27, 1
      %p192 = por %p190, %p191
      %p193 = scmp.ne.s32.totalorder %s184, %s185
      %p194 = scmp.eq.s32.totalorder %s27, 0
      %p195 = por %p193, %p194
      %p196 = scmp.ne.s32.totalorder %s184, %s185
      %p197 = scmp.eq.s32.totalorder %s28, 1
      %p198 = por %p196, %p197
      %p200 = scmp.ne.s32.totalorder %s185, %s199
      %p201 = scmp.eq.s32.totalorder %s28, 0
      %p202 = por %p200, %p201
      %s204 = sadd.s32 %s203, 1
      %p207 = scmp.eq.s32.totalorder %s22, 1
      %p208 = scmp.ne.s32.totalorder %s203, %s205
      %p209 = scmp.eq.s32.totalorder %s22, 0
      %p210 = por %p208, %p209
      %p211 = scmp.ne.s32.totalorder %s203, %s205
      %p212 = scmp.eq.s32.totalorder %s27, 1
      %p213 = por %p211, %p212
      %p214 = scmp.ne.s32.totalorder %s205, %s206
      %p215 = scmp.eq.s32.totalorder %s27, 0
      %p216 = por %p214, %p215
      %p217 = scmp.ne.s32.totalorder %s205, %s206
      %p218 = scmp.eq.s32.totalorder %s28, 1
      %p219 = por %p217, %p218
      %p221 = scmp.ne.s32.totalorder %s206, %s220
      %p222 = scmp.eq.s32.totalorder %s28, 0
      %p223 = por %p221, %p222
      %s225 = sadd.s32 %s224, 1
      %p228 = scmp.eq.s32.totalorder %s22, 1
      %p229 = scmp.ne.s32.totalorder %s224, %s226
      %p230 = scmp.eq.s32.totalorder %s22, 0
      %p231 = por %p229, %p230
      %p232 = scmp.ne.s32.totalorder %s224, %s226
      %p233 = scmp.eq.s32.totalorder %s27, 1
      %p234 = por %p232, %p233
      %p235 = scmp.ne.s32.totalorder %s226, %s227
      %p236 = scmp.eq.s32.totalorder %s27, 0
      %p237 = por %p235, %p236
      %p238 = scmp.ne.s32.totalorder %s226, %s227
      %p239 = scmp.eq.s32.totalorder %s28, 1
      %p240 = por %p238, %p239
      %p242 = scmp.ne.s32.totalorder %s227, %s241
      %p243 = scmp.eq.s32.totalorder %s28, 0
      %p244 = por %p242, %p243
      %s246 = sadd.s32 %s245, 1
      %p249 = scmp.eq.s32.totalorder %s22, 1
      %p250 = scmp.ne.s32.totalorder %s245, %s247
      %p251 = scmp.eq.s32.totalorder %s22, 0
      %p252 = por %p250, %p251
      %p253 = scmp.ne.s32.totalorder %s245, %s247
      %p254 = scmp.eq.s32.totalorder %s27, 1
      %p255 = por %p253, %p254
      %p256 = scmp.ne.s32.totalorder %s247, %s248
      %p257 = scmp.eq.s32.totalorder %s27, 0
      %p258 = por %p256, %p257
      %p259 = scmp.ne.s32.totalorder %s247, %s248
      %p260 = scmp.eq.s32.totalorder %s28, 1
      %p261 = por %p259, %p260
      %p263 = scmp.ne.s32.totalorder %s248, %s262
      %p264 = scmp.eq.s32.totalorder %s28, 0
      %p265 = por %p263, %p264
      %s266 = ssub.s32 %s22, %s29
      %p267 = scmp.eq.s32.totalorder %s266, 0
      %s269 = sadd.s32 %s268, 1
      %s270 = scalar_select %p267, %s268, %s269
      %p273 = pneg %p267
      %p274 = scmp.eq.s32.totalorder %s22, 1
      %p275 = por %p273, %p274
      %p276 = scmp.ne.s32.totalorder %s268, %s271
      %p277 = scmp.eq.s32.totalorder %s22, 0
      %p278 = por %p276, %p277
      %p279 = scmp.ne.s32.totalorder %s268, %s271
      %p280 = scmp.eq.s32.totalorder %s27, 1
      %p281 = por %p279, %p280
      %p282 = scmp.ne.s32.totalorder %s271, %s272
      %p283 = scmp.eq.s32.totalorder %s27, 0
      %p284 = por %p282, %p283
      %p285 = scmp.ne.s32.totalorder %s271, %s272
      %p286 = scmp.eq.s32.totalorder %s28, 1
      %p287 = por %p285, %p286
      %p289 = scmp.ne.s32.totalorder %s272, %s288
      %p290 = scmp.eq.s32.totalorder %s28, 0
      %p291 = por %p289, %p290
      %p292 = scmp.le.s32.totalorder 1, %s22
      %p293 = scmp.lt.s32.totalorder %s22, 3
      %p294 = pnand %p292, %p293
      %p295 = pneg %p294
      // Predicated region
      $region9: #{tpu_custom_call.1} parent=5 // pred_check
        _
      $region10: #{tpu_custom_call.1} parent=5 // pred_check_branch
        %297 = sbr.rel (%p294) target = $region12
      $region11: #{tpu_custom_call.1} parent=5 // pred_region
        %s298 = ssub.s32 %s22, 1
        // Predicated region
        $region13: #{tpu_custom_call.1} parent=11 // pred_check
          %p299 = pneg %p69
        $region14: #{tpu_custom_call.1} parent=11 // pred_check_branch
          %301 = sbr.rel (%p299) target = $region16
        $region15: #{tpu_custom_call.1} parent=11 // pred_region
          _
        $region16: #{tpu_custom_call.1} parent=11 // pred_fallthru
          _
        // Predicated region
        $region17: #{tpu_custom_call.1} parent=11 // pred_check
          %p302 = pneg %p90
        $region18: #{tpu_custom_call.1} parent=11 // pred_check_branch
          %304 = sbr.rel (%p302) target = $region20
        $region19: #{tpu_custom_call.1} parent=11 // pred_region
          _
        $region20: #{tpu_custom_call.1} parent=11 // pred_fallthru
          _
        // Predicated region
        $region21: #{tpu_custom_call.1} parent=11 // pred_check
          %p305 = pneg %p111
        $region22: #{tpu_custom_call.1} parent=11 // pred_check_branch
          %307 = sbr.rel (%p305) target = $region24
        $region23: #{tpu_custom_call.1} parent=11 // pred_region
          %s309 = ssub.s32 512, 512
          %310 = vsyncadd [#allocation4], %s309
          %s311 = sshll.u32 [#allocation3], 4
          %s312 = int_to_ptr.vmem [resolvable:$true] %s311
          %317 = dma.hbm_to_vmem [thread:$0]  %s3, 512, %s312, [#allocation4], 128, 128, 8
        $region24: #{tpu_custom_call.1} parent=11 // pred_fallthru
          _
        // Predicated region
        $region25: #{tpu_custom_call.1} parent=11 // pred_check
          %p318 = pneg %p132
        $region26: #{tpu_custom_call.1} parent=11 // pred_check_branch
          %320 = sbr.rel (%p318) target = $region28
        $region27: #{tpu_custom_call.1} parent=11 // pred_region
          _
        $region28: #{tpu_custom_call.1} parent=11 // pred_fallthru
          _
        // Predicated region
        $region29: #{tpu_custom_call.1} parent=11 // pred_check
          %p321 = pneg %p153
        $region30: #{tpu_custom_call.1} parent=11 // pred_check_branch
          %323 = sbr.rel (%p321) target = $region32
        $region31: #{tpu_custom_call.1} parent=11 // pred_region
          %s325 = ssub.s32 512, 512
          %326 = vsyncadd [#allocation7], %s325
          %s327 = sshll.u32 [#allocation6], 4
          %s328 = int_to_ptr.vmem [resolvable:$true] %s327
          %333 = dma.hbm_to_vmem [thread:$0]  %s5, 512, %s328, [#allocation7], 128, 128, 8
        $region32: #{tpu_custom_call.1} parent=11 // pred_fallthru
          _
        // Predicated region
        $region33: #{tpu_custom_call.1} parent=11 // pred_check
          %p334 = pneg %p174
        $region34: #{tpu_custom_call.1} parent=11 // pred_check_branch
          %336 = sbr.rel (%p334) target = $region36
        $region35: #{tpu_custom_call.1} parent=11 // pred_region
          _
        $region36: #{tpu_custom_call.1} parent=11 // pred_fallthru
          _
        // Predicated region
        $region37: #{tpu_custom_call.1} parent=11 // pred_check
          %p337 = pneg %p195
        $region38: #{tpu_custom_call.1} parent=11 // pred_check_branch
          %339 = sbr.rel (%p337) target = $region40
        $region39: #{tpu_custom_call.1} parent=11 // pred_region
          _
        $region40: #{tpu_custom_call.1} parent=11 // pred_fallthru
          _
        // Predicated region
        $region41: #{tpu_custom_call.1} parent=11 // pred_check
          %p340 = pneg %p216
        $region42: #{tpu_custom_call.1} parent=11 // pred_check_branch
          %342 = sbr.rel (%p340) target = $region44
        $region43: #{tpu_custom_call.1} parent=11 // pred_region
          _
        $region44: #{tpu_custom_call.1} parent=11 // pred_fallthru
          _
        // Predicated region
        $region45: #{tpu_custom_call.1} parent=11 // pred_check
          %p343 = pneg %p237
        $region46: #{tpu_custom_call.1} parent=11 // pred_check_branch
          %345 = sbr.rel (%p343) target = $region48
        $region47: #{tpu_custom_call.1} parent=11 // pred_region
          _
        $region48: #{tpu_custom_call.1} parent=11 // pred_fallthru
          _
        // Predicated region
        $region49: #{tpu_custom_call.1} parent=11 // pred_check
          %p346 = pneg %p258
        $region50: #{tpu_custom_call.1} parent=11 // pred_check_branch
          %348 = sbr.rel (%p346) target = $region52
        $region51: #{tpu_custom_call.1} parent=11 // pred_region
          _
        $region52: #{tpu_custom_call.1} parent=11 // pred_fallthru
          _
      $region12: #{tpu_custom_call.1} parent=5 // pred_fallthru
        _
      %p349 = scmp.lt.s32.totalorder %s22, 2
      // Predicated region
      $region53: #{tpu_custom_call.1} parent=5 // pred_check
        %p350 = pneg %p349
      $region54: #{tpu_custom_call.1} parent=5 // pred_check_branch
        %352 = sbr.rel (%p350) target = $region56
      $region55: #{tpu_custom_call.1} parent=5 // pred_region
        // Predicated region
        $region57: #{tpu_custom_call.1} parent=55 // pred_check
          %p353 = pneg %p42
        $region58: #{tpu_custom_call.1} parent=55 // pred_check_branch
          %355 = sbr.rel (%p353) target = $region60
        $region59: #{tpu_custom_call.1} parent=55 // pred_region
          %p356 = scmp.lt.s32.totalorder %s22, 1
          %s357 = scalar_select %p356, %s22, 1
          %s358 = smul.addr %s357, 4
          %s359 = smul.addr %s358, 8
          %s360 = scalar_lea.vmem %s0, %s359
        $region60: #{tpu_custom_call.1} parent=55 // pred_fallthru
          _
      $region56: #{tpu_custom_call.1} parent=5 // pred_fallthru
        _
      %p361 = scmp.le.s32.totalorder 1, %s22
      %p362 = scmp.lt.s32.totalorder %s22, 3
      %p363 = pnand %p361, %p362
      %p364 = pneg %p363
      // Predicated region
      $region61: #{tpu_custom_call.1} parent=5 // pred_check
        _
      $region62: #{tpu_custom_call.1} parent=5 // pred_check_branch
        %366 = sbr.rel (%p363) target = $region64
      $region63: #{tpu_custom_call.1} parent=5 // pred_region
        %s367 = ssub.s32 %s22, 1
        // Predicated region
        $region65: #{tpu_custom_call.1} parent=63 // pred_check
          %p368 = pneg %p111
        $region66: #{tpu_custom_call.1} parent=63 // pred_check_branch
          %370 = sbr.rel (%p368) target = $region68
        $region67: #{tpu_custom_call.1} parent=63 // pred_region
          %371 = dma.done [#allocation4], 512
        $region68: #{tpu_custom_call.1} parent=63 // pred_fallthru
          _
        // Predicated region
        $region69: #{tpu_custom_call.1} parent=63 // pred_check
          %p372 = pneg %p153
        $region70: #{tpu_custom_call.1} parent=63 // pred_check_branch
          %374 = sbr.rel (%p372) target = $region72
        $region71: #{tpu_custom_call.1} parent=63 // pred_region
          %375 = dma.done [#allocation7], 512
        $region72: #{tpu_custom_call.1} parent=63 // pred_fallthru
          _
        %p376 = scmp.lt.s32.totalorder %s27, 1
        %s377 = scalar_select %p376, %s27, 1
        %s378 = smul.addr %s377, 4
        %s379 = smul.addr %s378, 8
        %s380 = scalar_lea.vmem %s0, %s379
        %p381 = pneg %p48
        %p382 = pneg %p45
        %p383 = pneg %p69
        %p384 = pneg %p66
        %p385 = pneg %p90
        %p386 = pneg %p87
        %p387 = pneg %p111
        %p388 = pneg %p108
        %p389 = pneg %p132
        %p390 = pneg %p129
        %p391 = pneg %p153
        %p392 = pneg %p150
        %p393 = pneg %p174
        %p394 = pneg %p171
        %p395 = pneg %p195
        %p396 = pneg %p192
        %p397 = pneg %p216
        %p398 = pneg %p213
        %p399 = pneg %p237
        %p400 = pneg %p234
        %p401 = pneg %p258
        %p402 = pneg %p255
        %p403 = pneg %p284
        %p404 = pneg %p281
        %s405 = sand.u32 %s271, 1
        %s406 = scalar_lea.sflag [#allocation5], %s405
        %s407 = sand.u32 %s271, 1
        %s408 = smul.addr %s407, 8
        %s409 = scalar_lea.vmem [#allocation8], %s408
        %p410 = scmp.lt.s32.totalorder %s27, 1
        %s411 = scalar_select %p410, %s27, 1
        %s412 = smul.addr %s411, 4
        %s413 = smul.addr %s412, 8
        %s414 = scalar_lea.vmem %s0, %s413
        %v416 = vld [vmem:[%s414] sm:$0xff]
        %v417 = vld [vmem:[%s414 + $0x8] sm:$0xff]
        %v418 = vld [vmem:[%s414 + $0x10] sm:$0xff]
        %v419 = vld [vmem:[%s414 + $0x18] sm:$0xf]
        %v420 = vld [vmem:[%s414 + $0x1] sm:$0xff]
        %v421 = vld [vmem:[%s414 + $0x9] sm:$0xff]
        %v422 = vld [vmem:[%s414 + $0x11] sm:$0xff]
        %v423 = vld [vmem:[%s414 + $0x19] sm:$0xf]
        %v424 = vadd.f32 %v416, %v420
        %v425 = vadd.f32 %v417, %v421
        %v426 = vadd.f32 %v418, %v422
        %v427 = vadd.f32 %v419, %v423
        %v428 = vld [vmem:[%s414 + $0x2] sm:$0xff]
        %v429 = vld [vmem:[%s414 + $0xa] sm:$0xff]
        %v430 = vld [vmem:[%s414 + $0x12] sm:$0xff]
        %v431 = vld [vmem:[%s414 + $0x1a] sm:$0xf]
        %v432 = vadd.f32 %v424, %v428
        %v433 = vadd.f32 %v425, %v429
        %v434 = vadd.f32 %v426, %v430
        %v435 = vadd.f32 %v427, %v431
        %v436 = vld [vmem:[%s414 + $0x3] sm:$0xff]
        %v437 = vld [vmem:[%s414 + $0xb] sm:$0xff]
        %v438 = vld [vmem:[%s414 + $0x13] sm:$0xff]
        %v439 = vld [vmem:[%s414 + $0x1b] sm:$0xf]
        %v440 = vadd.f32 %v432, %v436
        %v441 = vadd.f32 %v433, %v437
        %v442 = vadd.f32 %v434, %v438
        %v443 = vadd.f32 %v435, %v439
        %v444 = vld [vmem:[%s414 + $0x4] sm:$0xff]
        %v445 = vld [vmem:[%s414 + $0xc] sm:$0xff]
        %v446 = vld [vmem:[%s414 + $0x14] sm:$0xff]
        %v447 = vld [vmem:[%s414 + $0x1c] sm:$0xf]
        %v448 = vadd.f32 %v440, %v444
        %v449 = vadd.f32 %v441, %v445
        %v450 = vadd.f32 %v442, %v446
        %v451 = vadd.f32 %v443, %v447
        %vm452 = vcmask 261120
        %453 = vst.msk [vmem:[#allocation2] sm:$0xff] %vm452, %v448
        %454 = vst.msk [vmem:[#allocation2 + $0x8] sm:$0xff] %vm452, %v449
        %455 = vst.msk [vmem:[#allocation2 + $0x10] sm:$0xff] %vm452, %v450
        %vm456 = vcmask 257024
        %457 = vst.msk [vmem:[#allocation2 + $0x18] sm:$0xf] %vm456, %v451
        %v458 = vld [vmem:[#allocation2] sm:$0xff]
        %v459 = vld [vmem:[#allocation2 + $0x5] sm:$0xff]
        %v460 = vadd.f32 %v458, %v459
        %v461 = vld [vmem:[#allocation2 + $0xa] sm:$0xff]
        %v462 = vadd.f32 %v460, %v461
        %v463 = vld [vmem:[#allocation2 + $0xf] sm:$0xff]
        %v464 = vadd.f32 %v462, %v463
        %v465 = vld [vmem:[#allocation2 + $0x14] sm:$0xff]
        %v466 = vadd.f32 %v464, %v465
        %v467 = vmul.f32 %v466, 0.04
        %v468 = vld [vmem:[%s414 + $0xc] sm:$0xff]
        %v469 = vsub.f32 %v468, %v467
        %v470 = vld [vmem:[%s1] sm:$0xff]
        %v471 = vld [vmem:[%s1 + $0x8] sm:$0xff]
        %v472 = vld [vmem:[%s1 + $0x10] sm:$0xff]
        %v473 = vld [vmem:[%s1 + $0x18] sm:$0xff]
        %v474 = vpack.c.bf16 %v469, %v469
        %v475 = vpack.c.bf16 %v471, %v470
        %v476 = vpack.c.bf16 %v473, %v472
        %v477 = vld [vmem:[%s2] sm:$0x1]
        %v479 = vlaneseq
        %v480 = vshrl.u32 %v479, 7
        %v481 = vsub.s32 0, %v480
        %v482 = vrot.slane %v477, %v481
        %v485 = vsel %vm452, %v474, 0
        %487 = vmatprep.subr.bf16.mxu0 0
        %488 = vmatpush1.bf16.msra.mxu0 %v475
        %489 = vmatprep.subr.bf16.mxu0 0
        %490 = vmatpush1.bf16.msra.mxu0 %v476
        %491 = vmatprep.subr.bf16.mxu0 0
        %492 = vmatpush1.bf16.msra.mxu0 0
        %493 = vmatprep.subr.bf16.mxu0 0
        %494 = vmatpush1.bf16.msra.mxu0 0
        %495 = vmatprep.subr.bf16.mxu0 0
        %496 = vmatpush1.bf16.msra.mxu0 0
        %497 = vmatprep.subr.bf16.mxu0 0
        %498 = vmatpush1.bf16.msra.mxu0 0
        %499 = vmatprep.subr.bf16.mxu0 0
        %500 = vmatpush1.bf16.msra.mxu0 0
        %501 = vmatprep.subr.bf16.mxu0 0
        %502 = vmatpush1.bf16.msra.mxu0 0
        %503 = vmatprep.subr.bf16.mxu0 0
        %504 = vmatpush1.bf16.msra.mxu0 0
        %505 = vmatprep.subr.bf16.mxu0 0
        %506 = vmatpush1.bf16.msra.mxu0 0
        %507 = vmatprep.subr.bf16.mxu0 0
        %508 = vmatpush1.bf16.msra.mxu0 0
        %509 = vmatprep.subr.bf16.mxu0 0
        %510 = vmatpush1.bf16.msra.mxu0 0
        %511 = vmatprep.subr.bf16.mxu0 0
        %512 = vmatpush1.bf16.msra.mxu0 0
        %513 = vmatprep.subr.bf16.mxu0 0
        %514 = vmatpush1.bf16.msra.mxu0 0
        %515 = vmatprep.subr.bf16.mxu0 0
        %516 = vmatpush1.bf16.msra.mxu0 0
        %517 = vmatprep.subr.bf16.mxu0 0
        %518 = vmatpush1.bf16.msra.mxu0 0
        %519 = vmatprep.mubr.bf16.mxu0 0
        %520 = vmatmul.mubr.bf16.gmra.mrb[0].mxu0 %v485
        %v521 = vpop.f32.mrb[0].mxu0
        %v522 = vadd.f32 %v482, %v521
        %v523 = vpop.f32.mrb[0].mxu0
        %v524 = vpop.f32.mrb[0].mxu0
        %v525 = vpop.f32.mrb[0].mxu0
        %526 = vdwg.mxu0
        %v527 = vpack.c.bf16 %v522, %v522
        %529 = vrot.lane.b32.xlu0 %v527, 96
        %v530 = vpop.permute.xlu0 %529
        %vm531 = vcmask 64512
        %v533 = vsel %vm531, %v527, 0
        %v536 = vsel %vm531, %v530, 0
        %538 = vmatprep.subr.bf16.mxu0 0
        %539 = vmatpush1.bf16.xpose.msra.mxu0 %v536
        %540 = vmatprep.subr.bf16.mxu0 0
        %541 = vmatpush1.bf16.xpose.msra.mxu0 0
        %542 = vmatprep.subr.bf16.mxu0 0
        %543 = vmatpush1.bf16.xpose.msra.mxu0 0
        %544 = vmatprep.subr.bf16.mxu0 0
        %545 = vmatpush1.bf16.xpose.msra.mxu0 0
        %546 = vmatprep.subr.bf16.mxu0 0
        %547 = vmatpush1.bf16.xpose.msra.mxu0 0
        %548 = vmatprep.subr.bf16.mxu0 0
        %549 = vmatpush1.bf16.xpose.msra.mxu0 0
        %550 = vmatprep.subr.bf16.mxu0 0
        %551 = vmatpush1.bf16.xpose.msra.mxu0 0
        %552 = vmatprep.subr.bf16.mxu0 0
        %553 = vmatpush1.bf16.xpose.msra.mxu0 0
        %554 = vmatprep.subr.bf16.mxu0 0
        %555 = vmatpush1.bf16.xpose.msra.mxu0 0
        %556 = vmatprep.subr.bf16.mxu0 0
        %557 = vmatpush1.bf16.xpose.msra.mxu0 0
        %558 = vmatprep.subr.bf16.mxu0 0
        %559 = vmatpush1.bf16.xpose.msra.mxu0 0
        %560 = vmatprep.subr.bf16.mxu0 0
        %561 = vmatpush1.bf16.xpose.msra.mxu0 0
        %562 = vmatprep.subr.bf16.mxu0 0
        %563 = vmatpush1.bf16.xpose.msra.mxu0 0
        %564 = vmatprep.subr.bf16.mxu0 0
        %565 = vmatpush1.bf16.xpose.msra.mxu0 0
        %566 = vmatprep.subr.bf16.mxu0 0
        %567 = vmatpush1.bf16.xpose.msra.mxu0 0
        %568 = vmatprep.subr.bf16.mxu0 0
        %569 = vmatpush1.bf16.xpose.msra.mxu0 0
        %570 = vmatprep.mubr.bf16.mxu0 0
        %571 = vmatmul.mubr.bf16.gmra.mrb[0].mxu0 %v533
        %v572 = vpop.f32.mrb[0].mxu0
        %v573 = vadd.f32 0.0, %v572
        %v574 = vpop.f32.mrb[0].mxu0
        %v575 = vpop.f32.mrb[0].mxu0
        %v576 = vpop.f32.mrb[0].mxu0
        %577 = vdwg.mxu0
        %v578 = vsel %vm531, %v573, -inf
        %579 = vmax.xlane.f32.xlu0 %v578
        %v580 = vpop.xlane.xlu0 %579
        %v581 = vsub.f32 %v573, %v580
        %v582 = vmul.f32 %v581, 1.442695
        %v583 = vpow.pop %v582
        %v584 = vsel %vm531, %v583, 0.0
        %585 = vadd.xlane.f32.xlu0 %v584
        %v586 = vpop.xlane.xlu0 %585
        %v587 = vrcp.pop %v586
        %v588 = vmul.f32 %v583, %v587
        %v589 = vpack.c.bf16 %v588, %v588
        %590 = vrot.lane.b32.xlu0 %v527, 64
        %v591 = vpop.permute.xlu0 %590
        %v593 = vsel %vm531, %v589, 0
        %vm595 = vcmask 1043456
        %v597 = vsel %vm595, %v591, 0
        %599 = vmatprep.subr.bf16.mxu0 0
        %600 = vmatpush1.bf16.msra.mxu0 %v597
        %601 = vmatprep.subr.bf16.mxu0 0
        %602 = vmatpush1.bf16.msra.mxu0 0
        %603 = vmatprep.subr.bf16.mxu0 0
        %604 = vmatpush1.bf16.msra.mxu0 0
        %605 = vmatprep.subr.bf16.mxu0 0
        %606 = vmatpush1.bf16.msra.mxu0 0
        %607 = vmatprep.subr.bf16.mxu0 0
        %608 = vmatpush1.bf16.msra.mxu0 0
        %609 = vmatprep.subr.bf16.mxu0 0
        %610 = vmatpush1.bf16.msra.mxu0 0
        %611 = vmatprep.subr.bf16.mxu0 0
        %612 = vmatpush1.bf16.msra.mxu0 0
        %613 = vmatprep.subr.bf16.mxu0 0
        %614 = vmatpush1.bf16.msra.mxu0 0
        %615 = vmatprep.subr.bf16.mxu0 0
        %616 = vmatpush1.bf16.msra.mxu0 0
        %617 = vmatprep.subr.bf16.mxu0 0
        %618 = vmatpush1.bf16.msra.mxu0 0
        %619 = vmatprep.subr.bf16.mxu0 0
        %620 = vmatpush1.bf16.msra.mxu0 0
        %621 = vmatprep.subr.bf16.mxu0 0
        %622 = vmatpush1.bf16.msra.mxu0 0
        %623 = vmatprep.subr.bf16.mxu0 0
        %624 = vmatpush1.bf16.msra.mxu0 0
        %625 = vmatprep.subr.bf16.mxu0 0
        %626 = vmatpush1.bf16.msra.mxu0 0
        %627 = vmatprep.subr.bf16.mxu0 0
        %628 = vmatpush1.bf16.msra.mxu0 0
        %629 = vmatprep.subr.bf16.mxu0 0
        %630 = vmatpush1.bf16.msra.mxu0 0
        %631 = vmatprep.mubr.bf16.mxu0 0
        %632 = vmatmul.mubr.bf16.gmra.mrb[0].mxu0 %v593
        %v633 = vpop.f32.mrb[0].mxu0
        %v634 = vadd.f32 0.0, %v633
        %v635 = vpop.f32.mrb[0].mxu0
        %v636 = vpop.f32.mrb[0].mxu0
        %v637 = vpop.f32.mrb[0].mxu0
        %638 = vdwg.mxu0
        %639 = vrot.lane.b32.xlu0 %v527, 120
        %v640 = vpop.permute.xlu0 %639
        %641 = vrot.lane.b32.xlu0 %v527, 88
        %v642 = vpop.permute.xlu0 %641
        %v644 = vsel %vm531, %v640, 0
        %v647 = vsel %vm531, %v642, 0
        %649 = vmatprep.subr.bf16.mxu0 0
        %650 = vmatpush1.bf16.xpose.msra.mxu0 %v647
        %651 = vmatprep.subr.bf16.mxu0 0
        %652 = vmatpush1.bf16.xpose.msra.mxu0 0
        %653 = vmatprep.subr.bf16.mxu0 0
        %654 = vmatpush1.bf16.xpose.msra.mxu0 0
        %655 = vmatprep.subr.bf16.mxu0 0
        %656 = vmatpush1.bf16.xpose.msra.mxu0 0
        %657 = vmatprep.subr.bf16.mxu0 0
        %658 = vmatpush1.bf16.xpose.msra.mxu0 0
        %659 = vmatprep.subr.bf16.mxu0 0
        %660 = vmatpush1.bf16.xpose.msra.mxu0 0
        %661 = vmatprep.subr.bf16.mxu0 0
        %662 = vmatpush1.bf16.xpose.msra.mxu0 0
        %663 = vmatprep.subr.bf16.mxu0 0
        %664 = vmatpush1.bf16.xpose.msra.mxu0 0
        %665 = vmatprep.subr.bf16.mxu0 0
        %666 = vmatpush1.bf16.xpose.msra.mxu0 0
        %667 = vmatprep.subr.bf16.mxu0 0
        %668 = vmatpush1.bf16.xpose.msra.mxu0 0
        %669 = vmatprep.subr.bf16.mxu0 0
        %670 = vmatpush1.bf16.xpose.msra.mxu0 0
        %671 = vmatprep.subr.bf16.mxu0 0
        %672 = vmatpush1.bf16.xpose.msra.mxu0 0
        %673 = vmatprep.subr.bf16.mxu0 0
        %674 = vmatpush1.bf16.xpose.msra.mxu0 0
        %675 = vmatprep.subr.bf16.mxu0 0
        %676 = vmatpush1.bf16.xpose.msra.mxu0 0
        %677 = vmatprep.subr.bf16.mxu0 0
        %678 = vmatpush1.bf16.xpose.msra.mxu0 0
        %679 = vmatprep.subr.bf16.mxu0 0
        %680 = vmatpush1.bf16.xpose.msra.mxu0 0
        %681 = vmatprep.mubr.bf16.mxu0 0
        %682 = vmatmul.mubr.bf16.gmra.mrb[0].mxu0 %v644
        %v683 = vpop.f32.mrb[0].mxu0
        %v684 = vadd.f32 0.0, %v683
        %v685 = vpop.f32.mrb[0].mxu0
        %v686 = vpop.f32.mrb[0].mxu0
        %v687 = vpop.f32.mrb[0].mxu0
        %688 = vdwg.mxu0
        %v689 = vsel %vm531, %v684, -inf
        %690 = vmax.xlane.f32.xlu0 %v689
        %v691 = vpop.xlane.xlu0 %690
        %v692 = vsub.f32 %v684, %v691
        %v693 = vmul.f32 %v692, 1.442695
        %v694 = vpow.pop %v693
        %v695 = vsel %vm531, %v694, 0.0
        %696 = vadd.xlane.f32.xlu0 %v695
        %v697 = vpop.xlane.xlu0 %696
        %v698 = vrcp.pop %v697
        %v699 = vmul.f32 %v694, %v698
        %v700 = vpack.c.bf16 %v699, %v699
        %701 = vrot.lane.b32.xlu0 %v527, 56
        %v702 = vpop.permute.xlu0 %701
        %v704 = vsel %vm531, %v700, 0
        %v707 = vsel %vm595, %v702, 0
        %709 = vmatprep.subr.bf16.mxu0 0
        %710 = vmatpush1.bf16.msra.mxu0 %v707
        %711 = vmatprep.subr.bf16.mxu0 0
        %712 = vmatpush1.bf16.msra.mxu0 0
        %713 = vmatprep.subr.bf16.mxu0 0
        %714 = vmatpush1.bf16.msra.mxu0 0
        %715 = vmatprep.subr.bf16.mxu0 0
        %716 = vmatpush1.bf16.msra.mxu0 0
        %717 = vmatprep.subr.bf16.mxu0 0
        %718 = vmatpush1.bf16.msra.mxu0 0
        %719 = vmatprep.subr.bf16.mxu0 0
        %720 = vmatpush1.bf16.msra.mxu0 0
        %721 = vmatprep.subr.bf16.mxu0 0
        %722 = vmatpush1.bf16.msra.mxu0 0
        %723 = vmatprep.subr.bf16.mxu0 0
        %724 = vmatpush1.bf16.msra.mxu0 0
        %725 = vmatprep.subr.bf16.mxu0 0
        %726 = vmatpush1.bf16.msra.mxu0 0
        %727 = vmatprep.subr.bf16.mxu0 0
        %728 = vmatpush1.bf16.msra.mxu0 0
        %729 = vmatprep.subr.bf16.mxu0 0
        %730 = vmatpush1.bf16.msra.mxu0 0
        %731 = vmatprep.subr.bf16.mxu0 0
        %732 = vmatpush1.bf16.msra.mxu0 0
        %733 = vmatprep.subr.bf16.mxu0 0
        %734 = vmatpush1.bf16.msra.mxu0 0
        %735 = vmatprep.subr.bf16.mxu0 0
        %736 = vmatpush1.bf16.msra.mxu0 0
        %737 = vmatprep.subr.bf16.mxu0 0
        %738 = vmatpush1.bf16.msra.mxu0 0
        %739 = vmatprep.subr.bf16.mxu0 0
        %740 = vmatpush1.bf16.msra.mxu0 0
        %741 = vmatprep.mubr.bf16.mxu0 0
        %742 = vmatmul.mubr.bf16.gmra.mrb[0].mxu0 %v704
        %v743 = vpop.f32.mrb[0].mxu0
        %v744 = vadd.f32 0.0, %v743
        %v745 = vpop.f32.mrb[0].mxu0
        %v746 = vpop.f32.mrb[0].mxu0
        %v747 = vpop.f32.mrb[0].mxu0
        %748 = vdwg.mxu0
        %749 = vrot.lane.b32.xlu0 %v527, 112
        %v750 = vpop.permute.xlu0 %749
        %751 = vrot.lane.b32.xlu0 %v527, 80
        %v752 = vpop.permute.xlu0 %751
        %v754 = vsel %vm531, %v750, 0
        %v757 = vsel %vm531, %v752, 0
        %759 = vmatprep.subr.bf16.mxu0 0
        %760 = vmatpush1.bf16.xpose.msra.mxu0 %v757
        %761 = vmatprep.subr.bf16.mxu0 0
        %762 = vmatpush1.bf16.xpose.msra.mxu0 0
        %763 = vmatprep.subr.bf16.mxu0 0
        %764 = vmatpush1.bf16.xpose.msra.mxu0 0
        %765 = vmatprep.subr.bf16.mxu0 0
        %766 = vmatpush1.bf16.xpose.msra.mxu0 0
        %767 = vmatprep.subr.bf16.mxu0 0
        %768 = vmatpush1.bf16.xpose.msra.mxu0 0
        %769 = vmatprep.subr.bf16.mxu0 0
        %770 = vmatpush1.bf16.xpose.msra.mxu0 0
        %771 = vmatprep.subr.bf16.mxu0 0
        %772 = vmatpush1.bf16.xpose.msra.mxu0 0
        %773 = vmatprep.subr.bf16.mxu0 0
        %774 = vmatpush1.bf16.xpose.msra.mxu0 0
        %775 = vmatprep.subr.bf16.mxu0 0
        %776 = vmatpush1.bf16.xpose.msra.mxu0 0
        %777 = vmatprep.subr.bf16.mxu0 0
        %778 = vmatpush1.bf16.xpose.msra.mxu0 0
        %779 = vmatprep.subr.bf16.mxu0 0
        %780 = vmatpush1.bf16.xpose.msra.mxu0 0
        %781 = vmatprep.subr.bf16.mxu0 0
        %782 = vmatpush1.bf16.xpose.msra.mxu0 0
        %783 = vmatprep.subr.bf16.mxu0 0
        %784 = vmatpush1.bf16.xpose.msra.mxu0 0
        %785 = vmatprep.subr.bf16.mxu0 0
        %786 = vmatpush1.bf16.xpose.msra.mxu0 0
        %787 = vmatprep.subr.bf16.mxu0 0
        %788 = vmatpush1.bf16.xpose.msra.mxu0 0
        %789 = vmatprep.subr.bf16.mxu0 0
        %790 = vmatpush1.bf16.xpose.msra.mxu0 0
        %791 = vmatprep.mubr.bf16.mxu0 0
        %792 = vmatmul.mubr.bf16.gmra.mrb[0].mxu0 %v754
        %v793 = vpop.f32.mrb[0].mxu0
        %v794 = vadd.f32 0.0, %v793
        %v795 = vpop.f32.mrb[0].mxu0
        %v796 = vpop.f32.mrb[0].mxu0
        %v797 = vpop.f32.mrb[0].mxu0
        %798 = vdwg.mxu0
        %v799 = vsel %vm531, %v794, -inf
        %800 = vmax.xlane.f32.xlu0 %v799
        %v801 = vpop.xlane.xlu0 %800
        %v802 = vsub.f32 %v794, %v801
        %v803 = vmul.f32 %v802, 1.442695
        %v804 = vpow.pop %v803
        %v805 = vsel %vm531, %v804, 0.0
        %806 = vadd.xlane.f32.xlu0 %v805
        %v807 = vpop.xlane.xlu0 %806
        %v808 = vrcp.pop %v807
        %v809 = vmul.f32 %v804, %v808
        %v810 = vpack.c.bf16 %v809, %v809
        %811 = vrot.lane.b32.xlu0 %v527, 48
        %v812 = vpop.permute.xlu0 %811
        %v814 = vsel %vm531, %v810, 0
        %v817 = vsel %vm595, %v812, 0
        %819 = vmatprep.subr.bf16.mxu0 0
        %820 = vmatpush1.bf16.msra.mxu0 %v817
        %821 = vmatprep.subr.bf16.mxu0 0
        %822 = vmatpush1.bf16.msra.mxu0 0
        %823 = vmatprep.subr.bf16.mxu0 0
        %824 = vmatpush1.bf16.msra.mxu0 0
        %825 = vmatprep.subr.bf16.mxu0 0
        %826 = vmatpush1.bf16.msra.mxu0 0
        %827 = vmatprep.subr.bf16.mxu0 0
        %828 = vmatpush1.bf16.msra.mxu0 0
        %829 = vmatprep.subr.bf16.mxu0 0
        %830 = vmatpush1.bf16.msra.mxu0 0
        %831 = vmatprep.subr.bf16.mxu0 0
        %832 = vmatpush1.bf16.msra.mxu0 0
        %833 = vmatprep.subr.bf16.mxu0 0
        %834 = vmatpush1.bf16.msra.mxu0 0
        %835 = vmatprep.subr.bf16.mxu0 0
        %836 = vmatpush1.bf16.msra.mxu0 0
        %837 = vmatprep.subr.bf16.mxu0 0
        %838 = vmatpush1.bf16.msra.mxu0 0
        %839 = vmatprep.subr.bf16.mxu0 0
        %840 = vmatpush1.bf16.msra.mxu0 0
        %841 = vmatprep.subr.bf16.mxu0 0
        %842 = vmatpush1.bf16.msra.mxu0 0
        %843 = vmatprep.subr.bf16.mxu0 0
        %844 = vmatpush1.bf16.msra.mxu0 0
        %845 = vmatprep.subr.bf16.mxu0 0
        %846 = vmatpush1.bf16.msra.mxu0 0
        %847 = vmatprep.subr.bf16.mxu0 0
        %848 = vmatpush1.bf16.msra.mxu0 0
        %849 = vmatprep.subr.bf16.mxu0 0
        %850 = vmatpush1.bf16.msra.mxu0 0
        %851 = vmatprep.mubr.bf16.mxu0 0
        %852 = vmatmul.mubr.bf16.gmra.mrb[0].mxu0 %v814
        %v853 = vpop.f32.mrb[0].mxu0
        %v854 = vadd.f32 0.0, %v853
        %v855 = vpop.f32.mrb[0].mxu0
        %v856 = vpop.f32.mrb[0].mxu0
        %v857 = vpop.f32.mrb[0].mxu0
        %858 = vdwg.mxu0
        %859 = vrot.lane.b32.xlu0 %v527, 104
        %v860 = vpop.permute.xlu0 %859
        %861 = vrot.lane.b32.xlu0 %v527, 72
        %v862 = vpop.permute.xlu0 %861
        %v864 = vsel %vm531, %v860, 0
        %v867 = vsel %vm531, %v862, 0
        %869 = vmatprep.subr.bf16.mxu0 0
        %870 = vmatpush1.bf16.xpose.msra.mxu0 %v867
        %871 = vmatprep.subr.bf16.mxu0 0
        %872 = vmatpush1.bf16.xpose.msra.mxu0 0
        %873 = vmatprep.subr.bf16.mxu0 0
        %874 = vmatpush1.bf16.xpose.msra.mxu0 0
        %875 = vmatprep.subr.bf16.mxu0 0
        %876 = vmatpush1.bf16.xpose.msra.mxu0 0
        %877 = vmatprep.subr.bf16.mxu0 0
        %878 = vmatpush1.bf16.xpose.msra.mxu0 0
        %879 = vmatprep.subr.bf16.mxu0 0
        %880 = vmatpush1.bf16.xpose.msra.mxu0 0
        %881 = vmatprep.subr.bf16.mxu0 0
        %882 = vmatpush1.bf16.xpose.msra.mxu0 0
        %883 = vmatprep.subr.bf16.mxu0 0
        %884 = vmatpush1.bf16.xpose.msra.mxu0 0
        %885 = vmatprep.subr.bf16.mxu0 0
        %886 = vmatpush1.bf16.xpose.msra.mxu0 0
        %887 = vmatprep.subr.bf16.mxu0 0
        %888 = vmatpush1.bf16.xpose.msra.mxu0 0
        %889 = vmatprep.subr.bf16.mxu0 0
        %890 = vmatpush1.bf16.xpose.msra.mxu0 0
        %891 = vmatprep.subr.bf16.mxu0 0
        %892 = vmatpush1.bf16.xpose.msra.mxu0 0
        %893 = vmatprep.subr.bf16.mxu0 0
        %894 = vmatpush1.bf16.xpose.msra.mxu0 0
        %895 = vmatprep.subr.bf16.mxu0 0
        %896 = vmatpush1.bf16.xpose.msra.mxu0 0
        %897 = vmatprep.subr.bf16.mxu0 0
        %898 = vmatpush1.bf16.xpose.msra.mxu0 0
        %899 = vmatprep.subr.bf16.mxu0 0
        %900 = vmatpush1.bf16.xpose.msra.mxu0 0
        %901 = vmatprep.mubr.bf16.mxu0 0
        %902 = vmatmul.mubr.bf16.gmra.mrb[0].mxu0 %v864
        %v903 = vpop.f32.mrb[0].mxu0
        %v904 = vadd.f32 0.0, %v903
        %v905 = vpop.f32.mrb[0].mxu0
        %v906 = vpop.f32.mrb[0].mxu0
        %v907 = vpop.f32.mrb[0].mxu0
        %908 = vdwg.mxu0
        %v909 = vsel %vm531, %v904, -inf
        %910 = vmax.xlane.f32.xlu0 %v909
        %v911 = vpop.xlane.xlu0 %910
        %v912 = vsub.f32 %v904, %v911
        %v913 = vmul.f32 %v912, 1.442695
        %v914 = vpow.pop %v913
        %v915 = vsel %vm531, %v914, 0.0
        %916 = vadd.xlane.f32.xlu0 %v915
        %v917 = vpop.xlane.xlu0 %916
        %v918 = vrcp.pop %v917
        %v919 = vmul.f32 %v914, %v918
        %v920 = vpack.c.bf16 %v919, %v919
        %921 = vrot.lane.b32.xlu0 %v527, 40
        %v922 = vpop.permute.xlu0 %921
        %v924 = vsel %vm531, %v920, 0
        %v927 = vsel %vm595, %v922, 0
        %929 = vmatprep.subr.bf16.mxu0 0
        %930 = vmatpush1.bf16.msra.mxu0 %v927
        %931 = vmatprep.subr.bf16.mxu0 0
        %932 = vmatpush1.bf16.msra.mxu0 0
        %933 = vmatprep.subr.bf16.mxu0 0
        %934 = vmatpush1.bf16.msra.mxu0 0
        %935 = vmatprep.subr.bf16.mxu0 0
        %936 = vmatpush1.bf16.msra.mxu0 0
        %937 = vmatprep.subr.bf16.mxu0 0
        %938 = vmatpush1.bf16.msra.mxu0 0
        %939 = vmatprep.subr.bf16.mxu0 0
        %940 = vmatpush1.bf16.msra.mxu0 0
        %941 = vmatprep.subr.bf16.mxu0 0
        %942 = vmatpush1.bf16.msra.mxu0 0
        %943 = vmatprep.subr.bf16.mxu0 0
        %944 = vmatpush1.bf16.msra.mxu0 0
        %945 = vmatprep.subr.bf16.mxu0 0
        %946 = vmatpush1.bf16.msra.mxu0 0
        %947 = vmatprep.subr.bf16.mxu0 0
        %948 = vmatpush1.bf16.msra.mxu0 0
        %949 = vmatprep.subr.bf16.mxu0 0
        %950 = vmatpush1.bf16.msra.mxu0 0
        %951 = vmatprep.subr.bf16.mxu0 0
        %952 = vmatpush1.bf16.msra.mxu0 0
        %953 = vmatprep.subr.bf16.mxu0 0
        %954 = vmatpush1.bf16.msra.mxu0 0
        %955 = vmatprep.subr.bf16.mxu0 0
        %956 = vmatpush1.bf16.msra.mxu0 0
        %957 = vmatprep.subr.bf16.mxu0 0
        %958 = vmatpush1.bf16.msra.mxu0 0
        %959 = vmatprep.subr.bf16.mxu0 0
        %960 = vmatpush1.bf16.msra.mxu0 0
        %961 = vmatprep.mubr.bf16.mxu0 0
        %962 = vmatmul.mubr.bf16.gmra.mrb[0].mxu0 %v924
        %v963 = vpop.f32.mrb[0].mxu0
        %v964 = vadd.f32 0.0, %v963
        %v965 = vpop.f32.mrb[0].mxu0
        %v966 = vpop.f32.mrb[0].mxu0
        %v967 = vpop.f32.mrb[0].mxu0
        %968 = vdwg.mxu0
        %970 = vrot.lane.b32.xlu0 %v744, 8
        %v971 = vpop.permute.xlu0 %970
        %974 = vrot.lane.b32.xlu0 %v854, 16
        %v975 = vpop.permute.xlu0 %974
        %978 = vrot.lane.b32.xlu0 %v964, 24
        %v979 = vpop.permute.xlu0 %978
        %v981 = vsel %vm531, %v634, %v971
        %vm982 = vcmask 130048
        %v983 = vsel %vm982, %v981, %v975
        %vm984 = vcmask 195584
        %v985 = vsel %vm984, %v983, %v979
        %v986 = vld [vmem:[#allocation3] sm:$0xff]
        %v987 = vld [vmem:[#allocation3 + $0x8] sm:$0xff]
        %v988 = vld [vmem:[#allocation3 + $0x10] sm:$0xff]
        %v989 = vld [vmem:[#allocation3 + $0x18] sm:$0xff]
        %v990 = vpack.c.bf16 %v985, %v985
        %v991 = vpack.c.bf16 %v987, %v986
        %v992 = vpack.c.bf16 %v989, %v988
        %v993 = vld [vmem:[%s4] sm:$0x1]
        %v995 = vlaneseq
        %v996 = vshrl.u32 %v995, 7
        %v997 = vsub.s32 0, %v996
        %v998 = vrot.slane %v993, %v997
        %v1001 = vsel %vm452, %v990, 0
        %1003 = vmatprep.subr.bf16.mxu0 0
        %1004 = vmatpush1.bf16.msra.mxu0 %v991
        %1005 = vmatprep.subr.bf16.mxu0 0
        %1006 = vmatpush1.bf16.msra.mxu0 %v992
        %1007 = vmatprep.subr.bf16.mxu0 0
        %1008 = vmatpush1.bf16.msra.mxu0 0
        %1009 = vmatprep.subr.bf16.mxu0 0
        %1010 = vmatpush1.bf16.msra.mxu0 0
        %1011 = vmatprep.subr.bf16.mxu0 0
        %1012 = vmatpush1.bf16.msra.mxu0 0
        %1013 = vmatprep.subr.bf16.mxu0 0
        %1014 = vmatpush1.bf16.msra.mxu0 0
        %1015 = vmatprep.subr.bf16.mxu0 0
        %1016 = vmatpush1.bf16.msra.mxu0 0
        %1017 = vmatprep.subr.bf16.mxu0 0
        %1018 = vmatpush1.bf16.msra.mxu0 0
        %1019 = vmatprep.subr.bf16.mxu0 0
        %1020 = vmatpush1.bf16.msra.mxu0 0
        %1021 = vmatprep.subr.bf16.mxu0 0
        %1022 = vmatpush1.bf16.msra.mxu0 0
        %1023 = vmatprep.subr.bf16.mxu0 0
        %1024 = vmatpush1.bf16.msra.mxu0 0
        %1025 = vmatprep.subr.bf16.mxu0 0
        %1026 = vmatpush1.bf16.msra.mxu0 0
        %1027 = vmatprep.subr.bf16.mxu0 0
        %1028 = vmatpush1.bf16.msra.mxu0 0
        %1029 = vmatprep.subr.bf16.mxu0 0
        %1030 = vmatpush1.bf16.msra.mxu0 0
        %1031 = vmatprep.subr.bf16.mxu0 0
        %1032 = vmatpush1.bf16.msra.mxu0 0
        %1033 = vmatprep.subr.bf16.mxu0 0
        %1034 = vmatpush1.bf16.msra.mxu0 0
        %1035 = vmatprep.mubr.bf16.mxu0 0
        %1036 = vmatmul.mubr.bf16.gmra.mrb[0].mxu0 %v1001
        %v1037 = vpop.f32.mrb[0].mxu0
        %v1038 = vadd.f32 %v998, %v1037
        %v1039 = vpop.f32.mrb[0].mxu0
        %v1040 = vpop.f32.mrb[0].mxu0
        %v1041 = vpop.f32.mrb[0].mxu0
        %1042 = vdwg.mxu0
        %v1043 = vld [vmem:[%s9] sm:$0x1]
        %v1044 = vld [vmem:[%s10] sm:$0x1]
        %v1045 = vadd.f32 %v469, %v1038
        %v1046 = vsel %vm452, %v1045, 0.0
        %1047 = vadd.xlane.f32.xlu0 %v1046
        %v1048 = vpop.xlane.xlu0 %1047
        %v1049 = vmul.f32 %v1048, 0.03125
        %v1050 = vsub.f32 %v1045, %v1049
        %v1051 = vmul.f32 %v1050, %v1050
        %v1052 = vsel %vm452, %v1051, 0.0
        %1053 = vadd.xlane.f32.xlu0 %v1052
        %v1054 = vpop.xlane.xlu0 %1053
        %v1055 = vmul.f32 %v1054, 0.03125
        %v1056 = vadd.f32 %v1055, 1e-05
        %v1057 = vrsqrt.pop %v1056
        %v1058 = vmul.f32 %v1050, %v1057
        %v1060 = vlaneseq
        %v1061 = vshrl.u32 %v1060, 7
        %v1062 = vsub.s32 0, %v1061
        %v1063 = vrot.slane %v1043, %v1062
        %v1065 = vmul.f32 %v1058, %v1063
        %v1067 = vlaneseq
        %v1068 = vshrl.u32 %v1067, 7
        %v1069 = vsub.s32 0, %v1068
        %v1070 = vrot.slane %v1044, %v1069
        %v1072 = vadd.f32 %v1065, %v1070
        %v1073 = vld [vmem:[#allocation6] sm:$0xff]
        %v1074 = vld [vmem:[#allocation6 + $0x8] sm:$0xff]
        %v1075 = vld [vmem:[#allocation6 + $0x10] sm:$0xff]
        %v1076 = vld [vmem:[#allocation6 + $0x18] sm:$0xff]
        %v1077 = vpack.c.bf16 %v1072, %v1072
        %v1078 = vpack.c.bf16 %v1074, %v1073
        %v1079 = vpack.c.bf16 %v1076, %v1075
        %v1080 = vld [vmem:[%s6] sm:$0x1]
        %v1082 = vlaneseq
        %v1083 = vshrl.u32 %v1082, 7
        %v1084 = vsub.s32 0, %v1083
        %v1085 = vrot.slane %v1080, %v1084
        %v1088 = vsel %vm452, %v1077, 0
        %1090 = vmatprep.subr.bf16.mxu0 0
        %1091 = vmatpush1.bf16.msra.mxu0 %v1078
        %1092 = vmatprep.subr.bf16.mxu0 0
        %1093 = vmatpush1.bf16.msra.mxu0 %v1079
        %1094 = vmatprep.subr.bf16.mxu0 0
        %1095 = vmatpush1.bf16.msra.mxu0 0
        %1096 = vmatprep.subr.bf16.mxu0 0
        %1097 = vmatpush1.bf16.msra.mxu0 0
        %1098 = vmatprep.subr.bf16.mxu0 0
        %1099 = vmatpush1.bf16.msra.mxu0 0
        %1100 = vmatprep.subr.bf16.mxu0 0
        %1101 = vmatpush1.bf16.msra.mxu0 0
        %1102 = vmatprep.subr.bf16.mxu0 0
        %1103 = vmatpush1.bf16.msra.mxu0 0
        %1104 = vmatprep.subr.bf16.mxu0 0
        %1105 = vmatpush1.bf16.msra.mxu0 0
        %1106 = vmatprep.subr.bf16.mxu0 0
        %1107 = vmatpush1.bf16.msra.mxu0 0
        %1108 = vmatprep.subr.bf16.mxu0 0
        %1109 = vmatpush1.bf16.msra.mxu0 0
        %1110 = vmatprep.subr.bf16.mxu0 0
        %1111 = vmatpush1.bf16.msra.mxu0 0
        %1112 = vmatprep.subr.bf16.mxu0 0
        %1113 = vmatpush1.bf16.msra.mxu0 0
        %1114 = vmatprep.subr.bf16.mxu0 0
        %1115 = vmatpush1.bf16.msra.mxu0 0
        %1116 = vmatprep.subr.bf16.mxu0 0
        %1117 = vmatpush1.bf16.msra.mxu0 0
        %1118 = vmatprep.subr.bf16.mxu0 0
        %1119 = vmatpush1.bf16.msra.mxu0 0
        %1120 = vmatprep.subr.bf16.mxu0 0
        %1121 = vmatpush1.bf16.msra.mxu0 0
        %1122 = vmatprep.mubr.bf16.mxu0 0
        %1123 = vmatmul.mubr.bf16.gmra.mrb[0].mxu0 %v1088
        %v1124 = vpop.f32.mrb[0].mxu0
        %v1125 = vadd.f32 %v1085, %v1124
        %v1126 = vpop.f32.mrb[0].mxu0
        %v1127 = vpop.f32.mrb[0].mxu0
        %v1128 = vpop.f32.mrb[0].mxu0
        %1129 = vdwg.mxu0
        %v1130 = vmax.f32 %v1125, 0.0
        %v1131 = vld [vmem:[%s7] sm:$0xff]
        %v1132 = vld [vmem:[%s7 + $0x8] sm:$0xff]
        %v1133 = vld [vmem:[%s7 + $0x10] sm:$0xff]
        %v1134 = vld [vmem:[%s7 + $0x18] sm:$0xff]
        %v1135 = vld [vmem:[%s7 + $0x20] sm:$0xff]
        %v1136 = vld [vmem:[%s7 + $0x28] sm:$0xff]
        %v1137 = vld [vmem:[%s7 + $0x30] sm:$0xff]
        %v1138 = vld [vmem:[%s7 + $0x38] sm:$0xff]
        %v1139 = vpack.c.bf16 %v1130, %v1130
        %v1140 = vpack.c.bf16 %v1132, %v1131
        %v1141 = vpack.c.bf16 %v1134, %v1133
        %v1142 = vpack.c.bf16 %v1136, %v1135
        %v1143 = vpack.c.bf16 %v1138, %v1137
        %v1144 = vld [vmem:[%s8] sm:$0x1]
        %v1146 = vlaneseq
        %v1147 = vshrl.u32 %v1146, 7
        %v1148 = vsub.s32 0, %v1147
        %v1149 = vrot.slane %v1144, %v1148
        %vm1151 = vcmask 523264
        %v1153 = vsel %vm1151, %v1139, 0
        %1155 = vmatprep.subr.bf16.mxu0 0
        %1156 = vmatpush1.bf16.msra.mxu0 %v1140
        %1157 = vmatprep.subr.bf16.mxu0 0
        %1158 = vmatpush1.bf16.msra.mxu0 %v1141
        %1159 = vmatprep.subr.bf16.mxu0 0
        %1160 = vmatpush1.bf16.msra.mxu0 %v1142
        %1161 = vmatprep.subr.bf16.mxu0 0
        %1162 = vmatpush1.bf16.msra.mxu0 %v1143
        %1163 = vmatprep.subr.bf16.mxu0 0
        %1164 = vmatpush1.bf16.msra.mxu0 0
        %1165 = vmatprep.subr.bf16.mxu0 0
        %1166 = vmatpush1.bf16.msra.mxu0 0
        %1167 = vmatprep.subr.bf16.mxu0 0
        %1168 = vmatpush1.bf16.msra.mxu0 0
        %1169 = vmatprep.subr.bf16.mxu0 0
        %1170 = vmatpush1.bf16.msra.mxu0 0
        %1171 = vmatprep.subr.bf16.mxu0 0
        %1172 = vmatpush1.bf16.msra.mxu0 0
        %1173 = vmatprep.subr.bf16.mxu0 0
        %1174 = vmatpush1.bf16.msra.mxu0 0
        %1175 = vmatprep.subr.bf16.mxu0 0
        %1176 = vmatpush1.bf16.msra.mxu0 0
        %1177 = vmatprep.subr.bf16.mxu0 0
        %1178 = vmatpush1.bf16.msra.mxu0 0
        %1179 = vmatprep.subr.bf16.mxu0 0
        %1180 = vmatpush1.bf16.msra.mxu0 0
        %1181 = vmatprep.subr.bf16.mxu0 0
        %1182 = vmatpush1.bf16.msra.mxu0 0
        %1183 = vmatprep.subr.bf16.mxu0 0
        %1184 = vmatpush1.bf16.msra.mxu0 0
        %1185 = vmatprep.subr.bf16.mxu0 0
        %1186 = vmatpush1.bf16.msra.mxu0 0
        %1187 = vmatprep.mubr.bf16.mxu0 0
        %1188 = vmatmul.mubr.bf16.gmra.mrb[0].mxu0 %v1153
        %v1189 = vpop.f32.mrb[0].mxu0
        %v1190 = vadd.f32 %v1149, %v1189
        %v1191 = vpop.f32.mrb[0].mxu0
        %v1192 = vpop.f32.mrb[0].mxu0
        %v1193 = vpop.f32.mrb[0].mxu0
        %1194 = vdwg.mxu0
        %v1195 = vadd.f32 %v1072, %v1190
        %v1196 = vsel %vm452, %v1195, 0.0
        %1197 = vadd.xlane.f32.xlu0 %v1196
        %v1198 = vpop.xlane.xlu0 %1197
        %v1199 = vmul.f32 %v1198, 0.03125
        %v1200 = vsub.f32 %v1195, %v1199
        %v1201 = vmul.f32 %v1200, %v1200
        %v1202 = vsel %vm452, %v1201, 0.0
        %1203 = vadd.xlane.f32.xlu0 %v1202
        %v1204 = vpop.xlane.xlu0 %1203
        %v1205 = vmul.f32 %v1204, 0.03125
        %v1206 = vadd.f32 %v1205, 1e-05
        %v1207 = vrsqrt.pop %v1206
        %v1208 = vmul.f32 %v1200, %v1207
        %v1209 = vmul.f32 %v1208, %v1063
        %v1210 = vadd.f32 %v1209, %v1070
        %v1211 = vadd.f32 %v1210, %v467
        %1212 = vst.msk [vmem:[%s409] sm:$0xff] %vm452, %v1211
        %s1213 = sand.u32 %s271, 1
        %s1214 = scalar_lea.sflag [#allocation5], %s1213
        %s1215 = sand.u32 %s271, 1
        %s1216 = smul.addr %s1215, 8
        %s1217 = scalar_lea.vmem [#allocation8], %s1216
        // Predicated region
        $region73: #{tpu_custom_call.1} parent=63 // pred_check
          %p1218 = pneg %p281
        $region74: #{tpu_custom_call.1} parent=63 // pred_check_branch
          %1220 = sbr.rel (%p1218) target = $region76
        $region75: #{tpu_custom_call.1} parent=63 // pred_region
          %s1222 = ssub.s32 128, 128
          %1223 = vsyncadd %s1214, %s1222
          %s1224 = smul.addr %s27, 128
          %s1225 = scalar_lea.hbm %s11, %s1224
          %s1227 = sshll.u32 %s1217, 4
          %s1228 = int_to_ptr.vmem [resolvable:$true] %s1227
          %1230 = dma.vmem_to_hbm [thread:$0]  %s1228, 128, %s1225, %s1214
        $region76: #{tpu_custom_call.1} parent=63 // pred_fallthru
          _
      $region64: #{tpu_custom_call.1} parent=5 // pred_fallthru
        _
      %p1231 = scmp.le.s32.totalorder 2, %s22
      // Predicated region
      $region77: #{tpu_custom_call.1} parent=5 // pred_check
        %p1232 = pneg %p1231
      $region78: #{tpu_custom_call.1} parent=5 // pred_check_branch
        %1234 = sbr.rel (%p1232) target = $region80
      $region79: #{tpu_custom_call.1} parent=5 // pred_region
        %s1235 = ssub.s32 %s22, 2
        // Predicated region
        $region81: #{tpu_custom_call.1} parent=79 // pred_check
          %p1236 = pneg %p287
        $region82: #{tpu_custom_call.1} parent=79 // pred_check_branch
          %1238 = sbr.rel (%p1236) target = $region84
        $region83: #{tpu_custom_call.1} parent=79 // pred_region
          %s1239 = sand.u32 %s272, 1
          %s1240 = scalar_lea.sflag [#allocation5], %s1239
          %s1241 = sand.u32 %s272, 1
          %s1242 = smul.addr %s1241, 8
          %s1243 = scalar_lea.vmem [#allocation8], %s1242
          %1244 = dma.done %s1240, 128
        $region84: #{tpu_custom_call.1} parent=79 // pred_fallthru
          _
      $region80: #{tpu_custom_call.1} parent=5 // pred_fallthru
        _
    $region6: #{tpu_custom_call.1} parent=1 // loop_footer
      %s26 = sadd.s32 1, %s22
    $region7: #{tpu_custom_call.1} parent=1 // loop_footer_branch
      %21 = sbr.rel target = $region3
    $region8: #{tpu_custom_call.1} parent=1 // loop_exit
      _
    %1245 = vsyncpa [#allocation4], 1
    %s1246 = scalar_lea.sflag [#allocation4], 1
    %1247 = vsyncpa %s1246, 1
    %1248 = vsyncpa [#allocation7], 1
    %1249 = vsyncpa [#allocation5], 1
    %s1250 = scalar_lea.sflag [#allocation5], 1
    %1251 = vsyncpa %s1250, 1

</llo_original>
